<compile_context>
chip_gen: v6e
topology: v6e:2x2x1
jax: 0.10.0
libtpu: 0.0.40
codegen_flags: <defaults>
</compile_context>

<pallas_src>
import functools

import jax
import jax.numpy as jnp
from jax.experimental import pallas as pl
from jax.experimental.pallas import tpu as pltpu

LANE = 128
_HIDDEN = (32, 64, 256, 512, 256, 64)


def _round_up(n, m):
    return ((n + m - 1) // m) * m


def _mlp_kernel(bin_task, out_dim, x_ref, *refs):
    """One batch tile of the 7-layer MLP. Weights + carried activation bf16, accum f32."""
    o_ref = refs[-1]
    wb = refs[:-1]

    h = x_ref[...]  # (TB, input_dim) bf16
    for li in range(6):
        w_ref, b_ref = wb[2 * li], wb[2 * li + 1]
        acc = jnp.dot(h, w_ref[...], preferred_element_type=jnp.float32)
        # bias add + ReLU in f32 (safe on v5e: no bf16 VALU work), then a single
        # down-cast so the carried activation is bf16 (the next dot needs bf16 anyway).
        h = jnp.maximum(acc + b_ref[...], 0.0).astype(jnp.bfloat16)

    w7, b7 = wb[12], wb[13]
    logits = jnp.dot(h, w7[...], preferred_element_type=jnp.float32) + b7[...]

    if bin_task:
        # nn.Sigmoid — numerically stable form; exp + reciprocal run on the EUP slot.
        e = jnp.exp(-jnp.abs(logits))
        inv = pl.reciprocal(1.0 + e, approx=True)
        out = jnp.where(logits >= 0, inv, e * inv)
    else:
        # nn.Softmax over the last dim; mask the zero-padded lanes out of the reduction.
        lane = jax.lax.broadcasted_iota(jnp.int32, logits.shape, 1)
        valid = lane < out_dim
        masked = jnp.where(valid, logits, jnp.float32(-1e30))
        m = jnp.max(masked, axis=-1, keepdims=True)
        e = jnp.where(valid, jnp.exp(masked - m), 0.0)
        out = e * pl.reciprocal(jnp.sum(e, axis=-1, keepdims=True), approx=True)

    o_ref[...] = out.astype(o_ref.dtype)


def init_params(key, input_dim, out_dim):
    """Deterministic synthetic parameters, f32, (in_dim, out_dim) layout (PyTorch transpose)."""
    dims = [input_dim] + list(_HIDDEN) + [out_dim]
    params = []
    for i in range(7):
        key, kw, kb = jax.random.split(key, 3)
        fan_in, fan_out = dims[i], dims[i + 1]
        bound = 1.0 / jnp.sqrt(jnp.float32(fan_in))
        w = jax.random.uniform(kw, (fan_in, fan_out), jnp.float32, -bound, bound)
        b = jax.random.uniform(kb, (1, fan_out), jnp.float32, -bound, bound)
        params.append((w, b))
    return params


def pack_params(params, input_dim, out_dim):
    """Pad hidden/out dims to 128-lane multiples, cast weights to bf16 (done once).

    Layer 1's contraction dim is left at input_dim (x is not lane-padded)."""
    dims = [input_dim] + list(_HIDDEN) + [out_dim]
    packed = []
    for i, (w, b) in enumerate(params):
        pin = input_dim if i == 0 else _round_up(dims[i], LANE)
        pout = _round_up(dims[i + 1], LANE)
        wp = jnp.zeros((pin, pout), jnp.float32).at[:w.shape[0], :w.shape[1]].set(w)
        bp = jnp.zeros((1, pout), jnp.float32).at[:, :b.shape[-1]].set(b.reshape(1, -1))
        packed.append((wp.astype(jnp.bfloat16), bp))
    return packed


def _choose_tile(batch, max_tile=512, min_steps=2, align=16):
    """Batch tile: as large as possible (amortize step + MXU fill/drain cost), but
    >= min_steps grid steps when batch allows (v7x megacore) and minimal padding.
    align=16 keeps bf16 sublane tiling happy when the block != full array."""
    batch_a = _round_up(batch, 8)
    if batch_a < 2 * align:
        return batch_a, batch_a          # tiny batch: single full-array tile
    steps = max(min_steps, pl.cdiv(batch_a, max_tile))
    steps = min(steps, batch_a // align)
    tb = _round_up(pl.cdiv(batch_a, steps), align)
    steps = pl.cdiv(batch_a, tb)
    return tb, tb * steps


def torch_classifier_forward(x, packed_params, out_dim, *, max_batch_tile=512):
    """x: (batch, input_dim) f32; packed_params from pack_params(). Returns (batch, out_dim)."""
    batch, input_dim = x.shape
    assert packed_params[0][0].shape[0] == input_dim
    out_pad = packed_params[-1][0].shape[1]
    bin_task = (out_dim == 1)

    tb, batch_pad = _choose_tile(batch, max_tile=max_batch_tile)

    # bf16 x halves the input DMA; layer 1 runs in bf16 anyway. Pad batch only.
    x_bf = x.astype(jnp.bfloat16)
    if batch_pad == batch:
        x_p = x_bf
    else:
        x_p = jnp.zeros((batch_pad, input_dim), jnp.bfloat16).at[:batch, :].set(x_bf)

    flat_params = []
    # x tile: last dim == full array dim (legal without 128-padding).
    in_specs = [pl.BlockSpec((tb, input_dim), lambda i: (i, 0))]
    for w, b in packed_params:
        flat_params.extend([w, b])
        # Weights/biases: whole array, same block every step -> stay VMEM-resident.
        in_specs.append(pl.BlockSpec(w.shape, lambda i: (0, 0)))
        in_specs.append(pl.BlockSpec(b.shape, lambda i: (0, 0)))

    flops = 0
    bytes_accessed = x_p.size * 2 + batch_pad * out_pad * 4
    for w, b in packed_params:
        flops += 2 * batch_pad * w.shape[0] * w.shape[1]
        bytes_accessed += w.size * 2 + b.size * 4
    transcendentals = batch_pad * out_pad

    out = pl.pallas_call(
        functools.partial(_mlp_kernel, bin_task, out_dim),
        out_shape=jax.ShapeDtypeStruct((batch_pad, out_pad), jnp.float32),
        grid=(batch_pad // tb,),
        in_specs=in_specs,
        out_specs=pl.BlockSpec((tb, out_pad), lambda i: (i, 0)),
        compiler_params=pltpu.CompilerParams(
            dimension_semantics=("parallel",),
            vmem_limit_bytes=32 * 1024 * 1024,
        ),
        cost_estimate=pl.CostEstimate(
            flops=flops,
            transcendentals=transcendentals,
            bytes_accessed=bytes_accessed,
        ),
    )(x_p, *flat_params)

    return out[:batch, :out_dim]


def _reference_forward(x, params, out_dim):
    """Pure-JAX f32 reference."""
    h = x
    for w, b in params[:-1]:
        h = jnp.maximum(h @ w + b, 0.0)
    w7, b7 = params[-1]
    logits = h @ w7 + b7
    if out_dim == 1:
        return jax.nn.sigmoid(logits)
    return jax.nn.softmax(logits, axis=-1)


if __name__ == "__main__":
    input_dim = 16
    key = jax.random.PRNGKey(0)
    key, kx = jax.random.split(key)

    # (batch, out_dim) cases: softmax + sigmoid at batch=8 (single tile), plus a
    # non-tile-multiple batch to exercise the multi-step / padded-tile path.
    cases = [(8, 8), (8, 1), (40, 8)]
    for batch, out_dim in cases:
        kb = jax.random.fold_in(kx, batch)
        x = jax.random.normal(kb, (batch, input_dim), jnp.float32)

        kparams = jax.random.fold_in(key, out_dim)
        params = init_params(kparams, input_dim, out_dim)
        packed = pack_params(params, input_dim, out_dim)

        out = torch_classifier_forward(x, packed, out_dim)
        out = jax.block_until_ready(out)

        ref = _reference_forward(x, params, out_dim)
        assert out.shape == (batch, out_dim)
        # bf16 weights/activations -> looser tolerance vs the f32 reference.
        assert jnp.allclose(out, ref, atol=5e-2, rtol=5e-2), \
            f"mismatch vs reference (batch={batch}, out_dim={out_dim})"

    print("KERNEL_OK")
</pallas_src>

<mosaic_0001>
module attributes {stable_mosaic.version = 11 : i64} {
  func.func @_mlp_kernel(%arg0: i32, %arg1: memref<8x16xbf16, #tpu.memory_space<vmem>>, %arg2: memref<16x128xbf16, #tpu.memory_space<vmem>>, %arg3: memref<1x128xf32, #tpu.memory_space<vmem>>, %arg4: memref<128x128xbf16, #tpu.memory_space<vmem>>, %arg5: memref<1x128xf32, #tpu.memory_space<vmem>>, %arg6: memref<128x256xbf16, #tpu.memory_space<vmem>>, %arg7: memref<1x256xf32, #tpu.memory_space<vmem>>, %arg8: memref<256x512xbf16, #tpu.memory_space<vmem>>, %arg9: memref<1x512xf32, #tpu.memory_space<vmem>>, %arg10: memref<512x256xbf16, #tpu.memory_space<vmem>>, %arg11: memref<1x256xf32, #tpu.memory_space<vmem>>, %arg12: memref<256x128xbf16, #tpu.memory_space<vmem>>, %arg13: memref<1x128xf32, #tpu.memory_space<vmem>>, %arg14: memref<128x128xbf16, #tpu.memory_space<vmem>>, %arg15: memref<1x128xf32, #tpu.memory_space<vmem>>, %arg16: memref<8x128xf32, #tpu.memory_space<vmem>>) attributes {dimension_semantics = [#tpu.dimension_semantics<parallel>], iteration_bounds = array<i64: 1>, scalar_prefetch = 0 : i64, scratch_operands = 0 : i64, tpu.core_type = #tpu.core_type<tc>, window_params = [{transform_indices = @transform_0, window_bounds = array<i64: 8, 16>}, {pipeline_mode = #tpu.pipeline_mode<synchronous>, transform_indices = @transform_1, window_bounds = array<i64: 16, 128>}, {pipeline_mode = #tpu.pipeline_mode<synchronous>, transform_indices = @transform_2, window_bounds = array<i64: 1, 128>}, {pipeline_mode = #tpu.pipeline_mode<synchronous>, transform_indices = @transform_3, window_bounds = array<i64: 128, 128>}, {pipeline_mode = #tpu.pipeline_mode<synchronous>, transform_indices = @transform_4, window_bounds = array<i64: 1, 128>}, {pipeline_mode = #tpu.pipeline_mode<synchronous>, transform_indices = @transform_5, window_bounds = array<i64: 128, 256>}, {pipeline_mode = #tpu.pipeline_mode<synchronous>, transform_indices = @transform_6, window_bounds = array<i64: 1, 256>}, {pipeline_mode = #tpu.pipeline_mode<synchronous>, transform_indices = @transform_7, window_bounds = array<i64: 256, 512>}, {pipeline_mode = #tpu.pipeline_mode<synchronous>, transform_indices = @transform_8, window_bounds = array<i64: 1, 512>}, {pipeline_mode = #tpu.pipeline_mode<synchronous>, transform_indices = @transform_9, window_bounds = array<i64: 512, 256>}, {pipeline_mode = #tpu.pipeline_mode<synchronous>, transform_indices = @transform_10, window_bounds = array<i64: 1, 256>}, {pipeline_mode = #tpu.pipeline_mode<synchronous>, transform_indices = @transform_11, window_bounds = array<i64: 256, 128>}, {pipeline_mode = #tpu.pipeline_mode<synchronous>, transform_indices = @transform_12, window_bounds = array<i64: 1, 128>}, {pipeline_mode = #tpu.pipeline_mode<synchronous>, transform_indices = @transform_13, window_bounds = array<i64: 128, 128>}, {pipeline_mode = #tpu.pipeline_mode<synchronous>, transform_indices = @transform_14, window_bounds = array<i64: 1, 128>}, {transform_indices = @transform_15, window_bounds = array<i64: 8, 128>}]} {
    %c0 = arith.constant 0 : index
    %c0_0 = arith.constant 0 : index
    %0 = vector.load %arg1[%c0, %c0_0] : memref<8x16xbf16, #tpu.memory_space<vmem>>, vector<8x16xbf16>
    %c0_1 = arith.constant 0 : index
    %c0_2 = arith.constant 0 : index
    %1 = vector.load %arg2[%c0_1, %c0_2] : memref<16x128xbf16, #tpu.memory_space<vmem>>, vector<16x128xbf16>
    %cst = arith.constant dense<0.000000e+00> : vector<8x128xf32>
    %2 = tpu.matmul %0, %1, %cst {dimension_numbers = #tpu.dot_dimension_numbers<[1], [0], [0], [1], [0, 0, 1, 1], [], []>} : vector<8x16xbf16>, vector<16x128xbf16>, vector<8x128xf32> -> vector<8x128xf32>
    %c0_3 = arith.constant 0 : index
    %c0_4 = arith.constant 0 : index
    %3 = vector.load %arg3[%c0_3, %c0_4] : memref<1x128xf32, #tpu.memory_space<vmem>>, vector<1x128xf32>
    %4 = vector.broadcast %3 : vector<1x128xf32> to vector<8x128xf32>
    %5 = arith.addf %2, %4 : vector<8x128xf32>
    %cst_5 = arith.constant 0.000000e+00 : f32
    %6 = vector.broadcast %cst_5 : f32 to vector<8x128xf32>
    %7 = arith.maximumf %5, %6 : vector<8x128xf32>
    %8 = arith.truncf %7 : vector<8x128xf32> to vector<8x128xbf16>
    %c0_6 = arith.constant 0 : index
    %c0_7 = arith.constant 0 : index
    %9 = vector.load %arg4[%c0_6, %c0_7] : memref<128x128xbf16, #tpu.memory_space<vmem>>, vector<128x128xbf16>
    %cst_8 = arith.constant dense<0.000000e+00> : vector<8x128xf32>
    %10 = tpu.matmul %8, %9, %cst_8 {dimension_numbers = #tpu.dot_dimension_numbers<[1], [0], [0], [1], [0, 0, 1, 1], [], []>} : vector<8x128xbf16>, vector<128x128xbf16>, vector<8x128xf32> -> vector<8x128xf32>
    %c0_9 = arith.constant 0 : index
    %c0_10 = arith.constant 0 : index
    %11 = vector.load %arg5[%c0_9, %c0_10] : memref<1x128xf32, #tpu.memory_space<vmem>>, vector<1x128xf32>
    %12 = vector.broadcast %11 : vector<1x128xf32> to vector<8x128xf32>
    %13 = arith.addf %10, %12 : vector<8x128xf32>
    %cst_11 = arith.constant 0.000000e+00 : f32
    %14 = vector.broadcast %cst_11 : f32 to vector<8x128xf32>
    %15 = arith.maximumf %13, %14 : vector<8x128xf32>
    %16 = arith.truncf %15 : vector<8x128xf32> to vector<8x128xbf16>
    %c0_12 = arith.constant 0 : index
    %c0_13 = arith.constant 0 : index
    %17 = vector.load %arg6[%c0_12, %c0_13] : memref<128x256xbf16, #tpu.memory_space<vmem>>, vector<128x256xbf16>
    %cst_14 = arith.constant dense<0.000000e+00> : vector<8x256xf32>
    %18 = tpu.matmul %16, %17, %cst_14 {dimension_numbers = #tpu.dot_dimension_numbers<[1], [0], [0], [1], [0, 0, 1, 1], [], []>} : vector<8x128xbf16>, vector<128x256xbf16>, vector<8x256xf32> -> vector<8x256xf32>
    %c0_15 = arith.constant 0 : index
    %c0_16 = arith.constant 0 : index
    %19 = vector.load %arg7[%c0_15, %c0_16] : memref<1x256xf32, #tpu.memory_space<vmem>>, vector<1x256xf32>
    %20 = vector.broadcast %19 : vector<1x256xf32> to vector<8x256xf32>
    %21 = arith.addf %18, %20 : vector<8x256xf32>
    %cst_17 = arith.constant 0.000000e+00 : f32
    %22 = vector.broadcast %cst_17 : f32 to vector<8x256xf32>
    %23 = arith.maximumf %21, %22 : vector<8x256xf32>
    %24 = arith.truncf %23 : vector<8x256xf32> to vector<8x256xbf16>
    %c0_18 = arith.constant 0 : index
    %c0_19 = arith.constant 0 : index
    %25 = vector.load %arg8[%c0_18, %c0_19] : memref<256x512xbf16, #tpu.memory_space<vmem>>, vector<256x512xbf16>
    %cst_20 = arith.constant dense<0.000000e+00> : vector<8x512xf32>
    %26 = tpu.matmul %24, %25, %cst_20 {dimension_numbers = #tpu.dot_dimension_numbers<[1], [0], [0], [1], [0, 0, 1, 1], [], []>} : vector<8x256xbf16>, vector<256x512xbf16>, vector<8x512xf32> -> vector<8x512xf32>
    %c0_21 = arith.constant 0 : index
    %c0_22 = arith.constant 0 : index
    %27 = vector.load %arg9[%c0_21, %c0_22] : memref<1x512xf32, #tpu.memory_space<vmem>>, vector<1x512xf32>
    %28 = vector.broadcast %27 : vector<1x512xf32> to vector<8x512xf32>
    %29 = arith.addf %26, %28 : vector<8x512xf32>
    %cst_23 = arith.constant 0.000000e+00 : f32
    %30 = vector.broadcast %cst_23 : f32 to vector<8x512xf32>
    %31 = arith.maximumf %29, %30 : vector<8x512xf32>
    %32 = arith.truncf %31 : vector<8x512xf32> to vector<8x512xbf16>
    %c0_24 = arith.constant 0 : index
    %c0_25 = arith.constant 0 : index
    %33 = vector.load %arg10[%c0_24, %c0_25] : memref<512x256xbf16, #tpu.memory_space<vmem>>, vector<512x256xbf16>
    %cst_26 = arith.constant dense<0.000000e+00> : vector<8x256xf32>
    %34 = tpu.matmul %32, %33, %cst_26 {dimension_numbers = #tpu.dot_dimension_numbers<[1], [0], [0], [1], [0, 0, 1, 1], [], []>} : vector<8x512xbf16>, vector<512x256xbf16>, vector<8x256xf32> -> vector<8x256xf32>
    %c0_27 = arith.constant 0 : index
    %c0_28 = arith.constant 0 : index
    %35 = vector.load %arg11[%c0_27, %c0_28] : memref<1x256xf32, #tpu.memory_space<vmem>>, vector<1x256xf32>
    %36 = vector.broadcast %35 : vector<1x256xf32> to vector<8x256xf32>
    %37 = arith.addf %34, %36 : vector<8x256xf32>
    %cst_29 = arith.constant 0.000000e+00 : f32
    %38 = vector.broadcast %cst_29 : f32 to vector<8x256xf32>
    %39 = arith.maximumf %37, %38 : vector<8x256xf32>
    %40 = arith.truncf %39 : vector<8x256xf32> to vector<8x256xbf16>
    %c0_30 = arith.constant 0 : index
    %c0_31 = arith.constant 0 : index
    %41 = vector.load %arg12[%c0_30, %c0_31] : memref<256x128xbf16, #tpu.memory_space<vmem>>, vector<256x128xbf16>
    %cst_32 = arith.constant dense<0.000000e+00> : vector<8x128xf32>
    %42 = tpu.matmul %40, %41, %cst_32 {dimension_numbers = #tpu.dot_dimension_numbers<[1], [0], [0], [1], [0, 0, 1, 1], [], []>} : vector<8x256xbf16>, vector<256x128xbf16>, vector<8x128xf32> -> vector<8x128xf32>
    %c0_33 = arith.constant 0 : index
    %c0_34 = arith.constant 0 : index
    %43 = vector.load %arg13[%c0_33, %c0_34] : memref<1x128xf32, #tpu.memory_space<vmem>>, vector<1x128xf32>
    %44 = vector.broadcast %43 : vector<1x128xf32> to vector<8x128xf32>
    %45 = arith.addf %42, %44 : vector<8x128xf32>
    %cst_35 = arith.constant 0.000000e+00 : f32
    %46 = vector.broadcast %cst_35 : f32 to vector<8x128xf32>
    %47 = arith.maximumf %45, %46 : vector<8x128xf32>
    %48 = arith.truncf %47 : vector<8x128xf32> to vector<8x128xbf16>
    %c0_36 = arith.constant 0 : index
    %c0_37 = arith.constant 0 : index
    %49 = vector.load %arg14[%c0_36, %c0_37] : memref<128x128xbf16, #tpu.memory_space<vmem>>, vector<128x128xbf16>
    %cst_38 = arith.constant dense<0.000000e+00> : vector<8x128xf32>
    %50 = tpu.matmul %48, %49, %cst_38 {dimension_numbers = #tpu.dot_dimension_numbers<[1], [0], [0], [1], [0, 0, 1, 1], [], []>} : vector<8x128xbf16>, vector<128x128xbf16>, vector<8x128xf32> -> vector<8x128xf32>
    %c0_39 = arith.constant 0 : index
    %c0_40 = arith.constant 0 : index
    %51 = vector.load %arg15[%c0_39, %c0_40] : memref<1x128xf32, #tpu.memory_space<vmem>>, vector<1x128xf32>
    %52 = vector.broadcast %51 : vector<1x128xf32> to vector<8x128xf32>
    %53 = arith.addf %50, %52 : vector<8x128xf32>
    %54 = tpu.iota {dimensions = array<i32: 1>} : vector<8x128xi32>
    %c8_i32 = arith.constant 8 : i32
    %55 = vector.broadcast %c8_i32 : i32 to vector<8x128xi32>
    %56 = arith.cmpi slt, %54, %55 : vector<8x128xi32>
    %cst_41 = arith.constant -1.000000e+30 : f32
    %57 = vector.broadcast %cst_41 : f32 to vector<8x128xf32>
    %58 = arith.select %56, %53, %57 : vector<8x128xi1>, vector<8x128xf32>
    %cst_42 = arith.constant dense<0xFF800000> : vector<8xf32>
    %59 = vector.multi_reduction <maximumf>, %58, %cst_42 [1] : vector<8x128xf32> to vector<8xf32>
    %60 = vector.shape_cast %59 : vector<8xf32> to vector<8x1xf32>
    %61 = vector.broadcast %60 : vector<8x1xf32> to vector<8x128xf32>
    %62 = arith.subf %58, %61 : vector<8x128xf32>
    %63 = math.exp %62 : vector<8x128xf32>
    %cst_43 = arith.constant 0.000000e+00 : f32
    %64 = vector.broadcast %cst_43 : f32 to vector<8x128xf32>
    %65 = arith.select %56, %63, %64 : vector<8x128xi1>, vector<8x128xf32>
    %cst_44 = arith.constant dense<0.000000e+00> : vector<8xf32>
    %66 = vector.multi_reduction <add>, %65, %cst_44 [1] : vector<8x128xf32> to vector<8xf32>
    %67 = vector.shape_cast %66 : vector<8xf32> to vector<8x1xf32>
    %68 = tpu.reciprocal %67 {approx = true} : vector<8x1xf32> -> vector<8x1xf32>
    %69 = vector.broadcast %68 : vector<8x1xf32> to vector<8x128xf32>
    %70 = arith.mulf %65, %69 : vector<8x128xf32>
    %c0_45 = arith.constant 0 : index
    %c0_46 = arith.constant 0 : index
    %71 = vector.load %arg16[%c0_45, %c0_46] : memref<8x128xf32, #tpu.memory_space<vmem>>, vector<8x128xf32>
    tpu.vector_store %arg16[%c0_45, %c0_46], %70 {strides = array<i32>} : memref<8x128xf32, #tpu.memory_space<vmem>>, vector<8x128xf32>,
    return
  }
  func.func @transform_0(%arg0: i32) -> (i32, i32) {
    %c0_i32 = arith.constant 0 : i32
    %c0_i32_0 = arith.constant 0 : i32
    return %arg0, %c0_i32 : i32, i32
  }
  func.func @transform_1(%arg0: i32) -> (i32, i32) {
    %c0_i32 = arith.constant 0 : i32
    %c0_i32_0 = arith.constant 0 : i32
    %c0_i32_1 = arith.constant 0 : i32
    return %c0_i32, %c0_i32_0 : i32, i32
  }
  func.func @transform_2(%arg0: i32) -> (i32, i32) {
    %c0_i32 = arith.constant 0 : i32
    %c0_i32_0 = arith.constant 0 : i32
    %c0_i32_1 = arith.constant 0 : i32
    return %c0_i32, %c0_i32_0 : i32, i32
  }
  func.func @transform_3(%arg0: i32) -> (i32, i32) {
    %c0_i32 = arith.constant 0 : i32
    %c0_i32_0 = arith.constant 0 : i32
    %c0_i32_1 = arith.constant 0 : i32
    return %c0_i32, %c0_i32_0 : i32, i32
  }
  func.func @transform_4(%arg0: i32) -> (i32, i32) {
    %c0_i32 = arith.constant 0 : i32
    %c0_i32_0 = arith.constant 0 : i32
    %c0_i32_1 = arith.constant 0 : i32
    return %c0_i32, %c0_i32_0 : i32, i32
  }
  func.func @transform_5(%arg0: i32) -> (i32, i32) {
    %c0_i32 = arith.constant 0 : i32
    %c0_i32_0 = arith.constant 0 : i32
    %c0_i32_1 = arith.constant 0 : i32
    return %c0_i32, %c0_i32_0 : i32, i32
  }
  func.func @transform_6(%arg0: i32) -> (i32, i32) {
    %c0_i32 = arith.constant 0 : i32
    %c0_i32_0 = arith.constant 0 : i32
    %c0_i32_1 = arith.constant 0 : i32
    return %c0_i32, %c0_i32_0 : i32, i32
  }
  func.func @transform_7(%arg0: i32) -> (i32, i32) {
    %c0_i32 = arith.constant 0 : i32
    %c0_i32_0 = arith.constant 0 : i32
    %c0_i32_1 = arith.constant 0 : i32
    return %c0_i32, %c0_i32_0 : i32, i32
  }
  func.func @transform_8(%arg0: i32) -> (i32, i32) {
    %c0_i32 = arith.constant 0 : i32
    %c0_i32_0 = arith.constant 0 : i32
    %c0_i32_1 = arith.constant 0 : i32
    return %c0_i32, %c0_i32_0 : i32, i32
  }
  func.func @transform_9(%arg0: i32) -> (i32, i32) {
    %c0_i32 = arith.constant 0 : i32
    %c0_i32_0 = arith.constant 0 : i32
    %c0_i32_1 = arith.constant 0 : i32
    return %c0_i32, %c0_i32_0 : i32, i32
  }
  func.func @transform_10(%arg0: i32) -> (i32, i32) {
    %c0_i32 = arith.constant 0 : i32
    %c0_i32_0 = arith.constant 0 : i32
    %c0_i32_1 = arith.constant 0 : i32
    return %c0_i32, %c0_i32_0 : i32, i32
  }
  func.func @transform_11(%arg0: i32) -> (i32, i32) {
    %c0_i32 = arith.constant 0 : i32
    %c0_i32_0 = arith.constant 0 : i32
    %c0_i32_1 = arith.constant 0 : i32
    return %c0_i32, %c0_i32_0 : i32, i32
  }
  func.func @transform_12(%arg0: i32) -> (i32, i32) {
    %c0_i32 = arith.constant 0 : i32
    %c0_i32_0 = arith.constant 0 : i32
    %c0_i32_1 = arith.constant 0 : i32
    return %c0_i32, %c0_i32_0 : i32, i32
  }
  func.func @transform_13(%arg0: i32) -> (i32, i32) {
    %c0_i32 = arith.constant 0 : i32
    %c0_i32_0 = arith.constant 0 : i32
    %c0_i32_1 = arith.constant 0 : i32
    return %c0_i32, %c0_i32_0 : i32, i32
  }
  func.func @transform_14(%arg0: i32) -> (i32, i32) {
    %c0_i32 = arith.constant 0 : i32
    %c0_i32_0 = arith.constant 0 : i32
    %c0_i32_1 = arith.constant 0 : i32
    return %c0_i32, %c0_i32_0 : i32, i32
  }
  func.func @transform_15(%arg0: i32) -> (i32, i32) {
    %c0_i32 = arith.constant 0 : i32
    %c0_i32_0 = arith.constant 0 : i32
    return %arg0, %c0_i32 : i32, i32
  }
}

</mosaic_0001>

<llo_original>
// kernel: tpu_custom_call.1
$region0: #{tpu_custom_call.1}
  #allocation0 [shape = 'u32[]', space=smem, size = 0x4, offset = 0x4, fixed_abs, tag = 'smem constant byte address 0x4 - core index']
  #allocation1 [shape = 'u32[144,128]{1,0:T(1,128)}', space=vmem, size = 0x12000, scoped, tag = 'internal scratch']
  %s0 = inlined_call_operand.hbm [shape: bf16[8,16], index: 0, kind: input, shape index: {}]
  %s1 = inlined_call_operand.hbm [shape: bf16[16,128], index: 1, kind: input, shape index: {}]
  %s2 = inlined_call_operand.vmem [shape: f32[1,128], index: 2, kind: input, shape index: {}]
  %s3 = inlined_call_operand.hbm [shape: bf16[128,128], index: 3, kind: input, shape index: {}]
  %s4 = inlined_call_operand.hbm [shape: f32[1,128], index: 4, kind: input, shape index: {}]
  %s5 = inlined_call_operand.hbm [shape: bf16[128,256], index: 5, kind: input, shape index: {}]
  %s6 = inlined_call_operand.vmem [shape: f32[1,256], index: 6, kind: input, shape index: {}]
  %s7 = inlined_call_operand.hbm [shape: bf16[256,512], index: 7, kind: input, shape index: {}]
  %s8 = inlined_call_operand.vmem [shape: f32[1,512], index: 8, kind: input, shape index: {}]
  %s9 = inlined_call_operand.hbm [shape: bf16[512,256], index: 9, kind: input, shape index: {}]
  %s10 = inlined_call_operand.vmem [shape: f32[1,256], index: 10, kind: input, shape index: {}]
  %s11 = inlined_call_operand.hbm [shape: bf16[256,128], index: 11, kind: input, shape index: {}]
  %s12 = inlined_call_operand.vmem [shape: f32[1,128], index: 12, kind: input, shape index: {}]
  %s13 = inlined_call_operand.hbm [shape: bf16[128,128], index: 13, kind: input, shape index: {}]
  %s14 = inlined_call_operand.vmem [shape: f32[1,128], index: 14, kind: input, shape index: {}]
  %s15 = inlined_call_operand.hbm [shape: f32[8,128], index: 15, kind: output, shape index: {}]
  %s16 = sld [smem:[#allocation0]]
  $region106: #{tpu_custom_call.1} parent=0
    _
  %s18 = ssub.s32 1, %s16
  %s19 = scalar_select 0, %s18, %s16
  $region1: #{tpu_custom_call.1} parent=0
    #allocation2 [shape = 'u8[2048]{0}', space=vmem, size = 0x800, scoped, tag = 'input window, operand 0, single buffered']
    #allocation3 [shape = 's32[1]{0}', space=sflag, size = 0x4, scoped, tag = 'scoped memory for tpu_custom_call.1']
    #allocation4 [shape = 's32[1]{0}', space=sflag, size = 0x4, scoped, tag = 'scoped memory for tpu_custom_call.1']
    #allocation5 [shape = 'u8[4096]{0}', space=vmem, size = 0x1000, scoped, tag = 'input window, operand 1, single buffered']
    #allocation6 [shape = 's32[1]{0}', space=sflag, size = 0x4, scoped, tag = 'scoped memory for tpu_custom_call.1']
    #allocation7 [shape = 'u8[32768]{0}', space=vmem, size = 0x8000, scoped, tag = 'input window, operand 3, single buffered']
    #allocation8 [shape = 'u8[512]{0}', space=vmem, size = 0x400, scoped, tag = 'input window, operand 4, single buffered']
    #allocation9 [shape = 's32[1]{0}', space=sflag, size = 0x4, scoped, tag = 'scoped memory for tpu_custom_call.1']
    #allocation10 [shape = 'u8[65536]{0}', space=vmem, size = 0x10000, scoped, tag = 'input window, operand 5, single buffered']
    #allocation11 [shape = 'u8[262144]{0}', space=vmem, size = 0x40000, scoped, tag = 'input window, operand 7, single buffered']
    #allocation12 [shape = 's32[1]{0}', space=sflag, size = 0x4, scoped, tag = 'scoped memory for tpu_custom_call.1']
    #allocation13 [shape = 'u8[262144]{0}', space=vmem, size = 0x40000, scoped, tag = 'input window, operand 9, single buffered']
    #allocation14 [shape = 'u8[65536]{0}', space=vmem, size = 0x10000, scoped, tag = 'input window, operand 11, single buffered']
    #allocation15 [shape = 's32[1]{0}', space=sflag, size = 0x4, scoped, tag = 'scoped memory for tpu_custom_call.1']
    #allocation16 [shape = 'u8[32768]{0}', space=vmem, size = 0x8000, scoped, tag = 'input window, operand 13, single buffered']
    #allocation17 [shape = 'u8[4096]{0}', space=vmem, size = 0x1000, scoped, tag = 'output window, operand 0, single buffered']
    %20 = vsyncpa [#allocation3], 0
    %21 = vsyncpa [#allocation6], 0
    %22 = vsyncpa [#allocation9], 0
    %23 = vsyncpa [#allocation12], 0
    %24 = vsyncpa [#allocation15], 0
    %25 = vsyncpa [#allocation4], 0
    // Predicated region
    $region2: #{tpu_custom_call.1} parent=1 // pred_check
      _
    $region3: #{tpu_custom_call.1} parent=1 // pred_check_branch
      %27 = sbr.rel (0) target = $region5
    $region4: #{tpu_custom_call.1} parent=1 // pred_region
      %s29 = ssub.s32 64, 64
      %30 = vsyncadd [#allocation3], %s29
      %s32 = sshll.u32 [#allocation2], 4
      %s33 = int_to_ptr.vmem [resolvable:$true] %s32
      %35 = dma.hbm_to_vmem [thread:$0]  %s0, 64, %s33, [#allocation3]
    $region5: #{tpu_custom_call.1} parent=1 // pred_fallthru
      _
    // Predicated region
    $region6: #{tpu_custom_call.1} parent=1 // pred_check
      _
    $region7: #{tpu_custom_call.1} parent=1 // pred_check_branch
      %37 = sbr.rel (0) target = $region9
    $region8: #{tpu_custom_call.1} parent=1 // pred_region
      %s39 = ssub.s32 128, 128
      %40 = vsyncadd [#allocation6], %s39
      %s41 = sshll.u32 [#allocation5], 4
      %s42 = int_to_ptr.vmem [resolvable:$true] %s41
      %47 = dma.hbm_to_vmem [thread:$0]  %s1, 128, %s42, [#allocation6], 64, 64, 4
    $region9: #{tpu_custom_call.1} parent=1 // pred_fallthru
      _
    // Predicated region
    $region10: #{tpu_custom_call.1} parent=1 // pred_check
      _
    $region11: #{tpu_custom_call.1} parent=1 // pred_check_branch
      %49 = sbr.rel (0) target = $region13
    $region12: #{tpu_custom_call.1} parent=1 // pred_region
      _
    $region13: #{tpu_custom_call.1} parent=1 // pred_fallthru
      _
    // Predicated region
    $region14: #{tpu_custom_call.1} parent=1 // pred_check
      _
    $region15: #{tpu_custom_call.1} parent=1 // pred_check_branch
      %51 = sbr.rel (0) target = $region17
    $region16: #{tpu_custom_call.1} parent=1 // pred_region
      %s53 = ssub.s32 1024, 1024
      %54 = vsyncadd [#allocation6], %s53
      %s55 = sshll.u32 [#allocation7], 4
      %s56 = int_to_ptr.vmem [resolvable:$true] %s55
      %61 = dma.hbm_to_vmem [thread:$0]  %s3, 1024, %s56, [#allocation6], 64, 64, 4
    $region17: #{tpu_custom_call.1} parent=1 // pred_fallthru
      _
    // Predicated region
    $region18: #{tpu_custom_call.1} parent=1 // pred_check
      _
    $region19: #{tpu_custom_call.1} parent=1 // pred_check_branch
      %63 = sbr.rel (0) target = $region21
    $region20: #{tpu_custom_call.1} parent=1 // pred_region
      %s65 = ssub.s32 16, 16
      %66 = vsyncadd [#allocation9], %s65
      %s68 = sshll.u32 [#allocation8], 4
      %s69 = int_to_ptr.vmem [resolvable:$true] %s68
      %71 = dma.hbm_to_vmem [thread:$0]  %s4, 16, %s69, [#allocation9]
    $region21: #{tpu_custom_call.1} parent=1 // pred_fallthru
      _
    // Predicated region
    $region22: #{tpu_custom_call.1} parent=1 // pred_check
      _
    $region23: #{tpu_custom_call.1} parent=1 // pred_check_branch
      %73 = sbr.rel (0) target = $region25
    $region24: #{tpu_custom_call.1} parent=1 // pred_region
      %s75 = ssub.s32 2048, 2048
      %76 = vsyncadd [#allocation9], %s75
      %s77 = sshll.u32 [#allocation10], 4
      %s78 = int_to_ptr.vmem [resolvable:$true] %s77
      %83 = dma.hbm_to_vmem [thread:$0]  %s5, 2048, %s78, [#allocation9], 128, 128, 8
    $region25: #{tpu_custom_call.1} parent=1 // pred_fallthru
      _
    // Predicated region
    $region26: #{tpu_custom_call.1} parent=1 // pred_check
      _
    $region27: #{tpu_custom_call.1} parent=1 // pred_check_branch
      %85 = sbr.rel (0) target = $region29
    $region28: #{tpu_custom_call.1} parent=1 // pred_region
      _
    $region29: #{tpu_custom_call.1} parent=1 // pred_fallthru
      _
    // Predicated region
    $region30: #{tpu_custom_call.1} parent=1 // pred_check
      _
    $region31: #{tpu_custom_call.1} parent=1 // pred_check_branch
      %87 = sbr.rel (0) target = $region33
    $region32: #{tpu_custom_call.1} parent=1 // pred_region
      %s89 = ssub.s32 8192, 8192
      %90 = vsyncadd [#allocation12], %s89
      %s91 = sshll.u32 [#allocation11], 4
      %s92 = int_to_ptr.vmem [resolvable:$true] %s91
      %97 = dma.hbm_to_vmem [thread:$0]  %s7, 8192, %s92, [#allocation12], 256, 256, 16
    $region33: #{tpu_custom_call.1} parent=1 // pred_fallthru
      _
    // Predicated region
    $region34: #{tpu_custom_call.1} parent=1 // pred_check
      _
    $region35: #{tpu_custom_call.1} parent=1 // pred_check_branch
      %99 = sbr.rel (0) target = $region37
    $region36: #{tpu_custom_call.1} parent=1 // pred_region
      _
    $region37: #{tpu_custom_call.1} parent=1 // pred_fallthru
      _
    // Predicated region
    $region38: #{tpu_custom_call.1} parent=1 // pred_check
      _
    $region39: #{tpu_custom_call.1} parent=1 // pred_check_branch
      %101 = sbr.rel (0) target = $region41
    $region40: #{tpu_custom_call.1} parent=1 // pred_region
      %s103 = ssub.s32 8192, 8192
      %104 = vsyncadd [#allocation12], %s103
      %s105 = sshll.u32 [#allocation13], 4
      %s106 = int_to_ptr.vmem [resolvable:$true] %s105
      %111 = dma.hbm_to_vmem [thread:$0]  %s9, 8192, %s106, [#allocation12], 128, 128, 8
    $region41: #{tpu_custom_call.1} parent=1 // pred_fallthru
      _
    // Predicated region
    $region42: #{tpu_custom_call.1} parent=1 // pred_check
      _
    $region43: #{tpu_custom_call.1} parent=1 // pred_check_branch
      %113 = sbr.rel (0) target = $region45
    $region44: #{tpu_custom_call.1} parent=1 // pred_region
      _
    $region45: #{tpu_custom_call.1} parent=1 // pred_fallthru
      _
    // Predicated region
    $region46: #{tpu_custom_call.1} parent=1 // pred_check
      _
    $region47: #{tpu_custom_call.1} parent=1 // pred_check_branch
      %115 = sbr.rel (0) target = $region49
    $region48: #{tpu_custom_call.1} parent=1 // pred_region
      %s117 = ssub.s32 2048, 2048
      %118 = vsyncadd [#allocation15], %s117
      %s119 = sshll.u32 [#allocation14], 4
      %s120 = int_to_ptr.vmem [resolvable:$true] %s119
      %125 = dma.hbm_to_vmem [thread:$0]  %s11, 2048, %s120, [#allocation15], 64, 64, 4
    $region49: #{tpu_custom_call.1} parent=1 // pred_fallthru
      _
    // Predicated region
    $region50: #{tpu_custom_call.1} parent=1 // pred_check
      _
    $region51: #{tpu_custom_call.1} parent=1 // pred_check_branch
      %127 = sbr.rel (0) target = $region53
    $region52: #{tpu_custom_call.1} parent=1 // pred_region
      _
    $region53: #{tpu_custom_call.1} parent=1 // pred_fallthru
      _
    // Predicated region
    $region54: #{tpu_custom_call.1} parent=1 // pred_check
      _
    $region55: #{tpu_custom_call.1} parent=1 // pred_check_branch
      %129 = sbr.rel (0) target = $region57
    $region56: #{tpu_custom_call.1} parent=1 // pred_region
      %s131 = ssub.s32 1024, 1024
      %132 = vsyncadd [#allocation15], %s131
      %s133 = sshll.u32 [#allocation16], 4
      %s134 = int_to_ptr.vmem [resolvable:$true] %s133
      %139 = dma.hbm_to_vmem [thread:$0]  %s13, 1024, %s134, [#allocation15], 64, 64, 4
    $region57: #{tpu_custom_call.1} parent=1 // pred_fallthru
      _
    // Predicated region
    $region58: #{tpu_custom_call.1} parent=1 // pred_check
      _
    $region59: #{tpu_custom_call.1} parent=1 // pred_check_branch
      %141 = sbr.rel (0) target = $region61
    $region60: #{tpu_custom_call.1} parent=1 // pred_region
      _
    $region61: #{tpu_custom_call.1} parent=1 // pred_fallthru
      _
    // Predicated region
    $region62: #{tpu_custom_call.1} parent=1 // pred_check
      _
    $region63: #{tpu_custom_call.1} parent=1 // pred_check_branch
      %143 = sbr.rel (0) target = $region65
    $region64: #{tpu_custom_call.1} parent=1 // pred_region
      %144 = dma.done [#allocation3], 64
    $region65: #{tpu_custom_call.1} parent=1 // pred_fallthru
      _
    // Predicated region
    $region66: #{tpu_custom_call.1} parent=1 // pred_check
      _
    $region67: #{tpu_custom_call.1} parent=1 // pred_check_branch
      %146 = sbr.rel (0) target = $region69
    $region68: #{tpu_custom_call.1} parent=1 // pred_region
      %147 = dma.done [#allocation6], 128
    $region69: #{tpu_custom_call.1} parent=1 // pred_fallthru
      _
    // Predicated region
    $region70: #{tpu_custom_call.1} parent=1 // pred_check
      _
    $region71: #{tpu_custom_call.1} parent=1 // pred_check_branch
      %149 = sbr.rel (0) target = $region73
    $region72: #{tpu_custom_call.1} parent=1 // pred_region
      %150 = dma.done [#allocation6], 1024
    $region73: #{tpu_custom_call.1} parent=1 // pred_fallthru
      _
    // Predicated region
    $region74: #{tpu_custom_call.1} parent=1 // pred_check
      _
    $region75: #{tpu_custom_call.1} parent=1 // pred_check_branch
      %152 = sbr.rel (0) target = $region77
    $region76: #{tpu_custom_call.1} parent=1 // pred_region
      %153 = dma.done [#allocation9], 16
    $region77: #{tpu_custom_call.1} parent=1 // pred_fallthru
      _
    // Predicated region
    $region78: #{tpu_custom_call.1} parent=1 // pred_check
      _
    $region79: #{tpu_custom_call.1} parent=1 // pred_check_branch
      %155 = sbr.rel (0) target = $region81
    $region80: #{tpu_custom_call.1} parent=1 // pred_region
      %156 = dma.done [#allocation9], 2048
    $region81: #{tpu_custom_call.1} parent=1 // pred_fallthru
      _
    // Predicated region
    $region82: #{tpu_custom_call.1} parent=1 // pred_check
      _
    $region83: #{tpu_custom_call.1} parent=1 // pred_check_branch
      %158 = sbr.rel (0) target = $region85
    $region84: #{tpu_custom_call.1} parent=1 // pred_region
      %159 = dma.done [#allocation12], 8192
    $region85: #{tpu_custom_call.1} parent=1 // pred_fallthru
      _
    // Predicated region
    $region86: #{tpu_custom_call.1} parent=1 // pred_check
      _
    $region87: #{tpu_custom_call.1} parent=1 // pred_check_branch
      %161 = sbr.rel (0) target = $region89
    $region88: #{tpu_custom_call.1} parent=1 // pred_region
      %162 = dma.done [#allocation12], 8192
    $region89: #{tpu_custom_call.1} parent=1 // pred_fallthru
      _
    // Predicated region
    $region90: #{tpu_custom_call.1} parent=1 // pred_check
      _
    $region91: #{tpu_custom_call.1} parent=1 // pred_check_branch
      %164 = sbr.rel (0) target = $region93
    $region92: #{tpu_custom_call.1} parent=1 // pred_region
      %165 = dma.done [#allocation15], 2048
    $region93: #{tpu_custom_call.1} parent=1 // pred_fallthru
      _
    // Predicated region
    $region94: #{tpu_custom_call.1} parent=1 // pred_check
      _
    $region95: #{tpu_custom_call.1} parent=1 // pred_check_branch
      %167 = sbr.rel (0) target = $region97
    $region96: #{tpu_custom_call.1} parent=1 // pred_region
      %168 = dma.done [#allocation15], 1024
    $region97: #{tpu_custom_call.1} parent=1 // pred_fallthru
      _
    %v170 = vld [vmem:[#allocation2] sm:$0xf]
    %v171 = vld [vmem:[#allocation5] sm:$0xf]
    %v172 = vld [vmem:[#allocation5 + $0x4] sm:$0xf]
    %v173 = vld [vmem:[%s2] sm:$0x1]
    %v175 = vlaneseq
    %v176 = vshrl.u32 %v175, 7
    %v177 = vsub.s32 0, %v176
    %v178 = vrot.slane %v173, %v177
    %v182 = vunpack.c.l.b16 %v171
    %v183 = vunpack.c.l.b16 %v172
    %v184 = vpack.c.b16 %v183, %v182
    %vm186 = vcmask 130048
    %v188 = vsel %vm186, %v170, 0
    %190 = vmatprep.subr.bf16.mxu0 0
    %191 = vmatpush1.bf16.msra.mxu0 0
    %192 = vmatprep.subr.bf16.mxu0 0
    %193 = vmatpush1.bf16.msra.mxu0 0
    %194 = vmatprep.subr.bf16.mxu0 0
    %195 = vmatpush1.bf16.msra.mxu0 0
    %196 = vmatprep.subr.bf16.mxu0 0
    %197 = vmatpush1.bf16.msra.mxu0 0
    %198 = vmatprep.subr.bf16.mxu0 0
    %199 = vmatpush1.bf16.msra.mxu0 0
    %200 = vmatprep.subr.bf16.mxu0 0
    %201 = vmatpush1.bf16.msra.mxu0 0
    %202 = vmatprep.subr.bf16.mxu0 0
    %203 = vmatpush1.bf16.msra.mxu0 0
    %204 = vmatprep.subr.bf16.mxu0 0
    %205 = vmatpush1.bf16.msra.mxu0 %v184
    %206 = vmatprep.subr.bf16.mxu0 0
    %207 = vmatpush2.bf16.msra.mxu0 0
    %208 = vmatprep.subr.bf16.mxu0 0
    %209 = vmatpush2.bf16.msra.mxu0 0
    %210 = vmatprep.subr.bf16.mxu0 0
    %211 = vmatpush2.bf16.msra.mxu0 0
    %212 = vmatprep.subr.bf16.mxu0 0
    %213 = vmatpush2.bf16.msra.mxu0 0
    %214 = vmatprep.subr.bf16.mxu0 0
    %215 = vmatpush2.bf16.msra.mxu0 0
    %216 = vmatprep.subr.bf16.mxu0 0
    %217 = vmatpush2.bf16.msra.mxu0 0
    %218 = vmatprep.subr.bf16.mxu0 0
    %219 = vmatpush2.bf16.msra.mxu0 0
    %220 = vmatprep.subr.bf16.mxu0 0
    %221 = vmatpush2.bf16.msra.mxu0 0
    %222 = vmatprep.mubr.bf16.mxu0 0
    %223 = vmatmul.mubr.bf16.gmra.mxu0 %v188
    %v224 = vpop.f32.mrf.mxu0
    %v225 = vadd.f32 %v178, %v224
    %v226 = vpop.f32.mrf.mxu0
    %v227 = vpop.f32.mrf.mxu0
    %v228 = vpop.f32.mrf.mxu0
    %229 = vdwg.mxu0
    %v230 = vmax.f32 %v225, 0.0
    %v231 = vpack.c.bf16 %v230, %v230
    %v232 = vld [vmem:[#allocation7] sm:$0xf]
    %v233 = vld [vmem:[#allocation7 + $0x4] sm:$0xf]
    %v234 = vld [vmem:[#allocation7 + $0x8] sm:$0xf]
    %v235 = vld [vmem:[#allocation7 + $0xc] sm:$0xf]
    %v236 = vld [vmem:[#allocation7 + $0x10] sm:$0xf]
    %v237 = vld [vmem:[#allocation7 + $0x14] sm:$0xf]
    %v238 = vld [vmem:[#allocation7 + $0x18] sm:$0xf]
    %v239 = vld [vmem:[#allocation7 + $0x1c] sm:$0xf]
    %v240 = vld [vmem:[#allocation7 + $0x20] sm:$0xf]
    %v241 = vld [vmem:[#allocation7 + $0x24] sm:$0xf]
    %v242 = vld [vmem:[#allocation7 + $0x28] sm:$0xf]
    %v243 = vld [vmem:[#allocation7 + $0x2c] sm:$0xf]
    %v244 = vld [vmem:[#allocation7 + $0x30] sm:$0xf]
    %v245 = vld [vmem:[#allocation7 + $0x34] sm:$0xf]
    %v246 = vld [vmem:[#allocation7 + $0x38] sm:$0xf]
    %v247 = vld [vmem:[#allocation7 + $0x3c] sm:$0xf]
    %v248 = vld [vmem:[#allocation8] sm:$0x1]
    %v250 = vlaneseq
    %v251 = vshrl.u32 %v250, 7
    %v252 = vsub.s32 0, %v251
    %v253 = vrot.slane %v248, %v252
    %v271 = vunpack.c.l.b16 %v232
    %v272 = vunpack.c.l.b16 %v233
    %v273 = vunpack.c.l.b16 %v234
    %v274 = vunpack.c.l.b16 %v235
    %v275 = vunpack.c.l.b16 %v236
    %v276 = vunpack.c.l.b16 %v237
    %v277 = vunpack.c.l.b16 %v238
    %v278 = vunpack.c.l.b16 %v239
    %v279 = vunpack.c.l.b16 %v240
    %v280 = vunpack.c.l.b16 %v241
    %v281 = vunpack.c.l.b16 %v242
    %v282 = vunpack.c.l.b16 %v243
    %v283 = vunpack.c.l.b16 %v244
    %v284 = vunpack.c.l.b16 %v245
    %v285 = vunpack.c.l.b16 %v246
    %v286 = vunpack.c.l.b16 %v247
    %v287 = vpack.c.b16 %v272, %v271
    %v288 = vpack.c.b16 %v274, %v273
    %v289 = vpack.c.b16 %v276, %v275
    %v290 = vpack.c.b16 %v278, %v277
    %v291 = vpack.c.b16 %v280, %v279
    %v292 = vpack.c.b16 %v282, %v281
    %v293 = vpack.c.b16 %v284, %v283
    %v294 = vpack.c.b16 %v286, %v285
    %303 = vmatprep.subr.bf16.mxu0 0
    %304 = vmatpush1.bf16.msra.mxu0 %v294
    %305 = vmatprep.subr.bf16.mxu0 0
    %306 = vmatpush1.bf16.msra.mxu0 %v293
    %307 = vmatprep.subr.bf16.mxu0 0
    %308 = vmatpush1.bf16.msra.mxu0 %v292
    %309 = vmatprep.subr.bf16.mxu0 0
    %310 = vmatpush1.bf16.msra.mxu0 %v291
    %311 = vmatprep.subr.bf16.mxu0 0
    %312 = vmatpush1.bf16.msra.mxu0 %v290
    %313 = vmatprep.subr.bf16.mxu0 0
    %314 = vmatpush1.bf16.msra.mxu0 %v289
    %315 = vmatprep.subr.bf16.mxu0 0
    %316 = vmatpush1.bf16.msra.mxu0 %v288
    %317 = vmatprep.subr.bf16.mxu0 0
    %318 = vmatpush1.bf16.msra.mxu0 %v287
    %319 = vmatprep.subr.bf16.mxu0 0
    %320 = vmatpush2.bf16.msra.mxu0 0
    %321 = vmatprep.subr.bf16.mxu0 0
    %322 = vmatpush2.bf16.msra.mxu0 0
    %323 = vmatprep.subr.bf16.mxu0 0
    %324 = vmatpush2.bf16.msra.mxu0 0
    %325 = vmatprep.subr.bf16.mxu0 0
    %326 = vmatpush2.bf16.msra.mxu0 0
    %327 = vmatprep.subr.bf16.mxu0 0
    %328 = vmatpush2.bf16.msra.mxu0 0
    %329 = vmatprep.subr.bf16.mxu0 0
    %330 = vmatpush2.bf16.msra.mxu0 0
    %331 = vmatprep.subr.bf16.mxu0 0
    %332 = vmatpush2.bf16.msra.mxu0 0
    %333 = vmatprep.subr.bf16.mxu0 0
    %334 = vmatpush2.bf16.msra.mxu0 0
    %335 = vmatprep.mubr.bf16.mxu0 0
    %336 = vmatmul.mubr.bf16.gmra.mxu0 %v231
    %v337 = vpop.f32.mrf.mxu0
    %v338 = vadd.f32 %v253, %v337
    %v339 = vpop.f32.mrf.mxu0
    %v340 = vpop.f32.mrf.mxu0
    %v341 = vpop.f32.mrf.mxu0
    %342 = vdwg.mxu0
    %v343 = vmax.f32 %v338, 0.0
    %v344 = vpack.c.bf16 %v343, %v343
    %v345 = vld [vmem:[#allocation10] sm:$0xff]
    %v346 = vld [vmem:[#allocation10 + $0x8] sm:$0xff]
    %v347 = vld [vmem:[#allocation10 + $0x10] sm:$0xff]
    %v348 = vld [vmem:[#allocation10 + $0x18] sm:$0xff]
    %v349 = vld [vmem:[#allocation10 + $0x20] sm:$0xff]
    %v350 = vld [vmem:[#allocation10 + $0x28] sm:$0xff]
    %v351 = vld [vmem:[#allocation10 + $0x30] sm:$0xff]
    %v352 = vld [vmem:[#allocation10 + $0x38] sm:$0xff]
    %v353 = vld [vmem:[#allocation10 + $0x40] sm:$0xff]
    %v354 = vld [vmem:[#allocation10 + $0x48] sm:$0xff]
    %v355 = vld [vmem:[#allocation10 + $0x50] sm:$0xff]
    %v356 = vld [vmem:[#allocation10 + $0x58] sm:$0xff]
    %v357 = vld [vmem:[#allocation10 + $0x60] sm:$0xff]
    %v358 = vld [vmem:[#allocation10 + $0x68] sm:$0xff]
    %v359 = vld [vmem:[#allocation10 + $0x70] sm:$0xff]
    %v360 = vld [vmem:[#allocation10 + $0x78] sm:$0xff]
    %v361 = vld [vmem:[%s6] sm:$0x3]
    %v363 = vlaneseq
    %v364 = vshrl.u32 %v363, 7
    %v365 = vsub.s32 0, %v364
    %v366 = vrot.slane %v361, %v365
    %v367 = vlaneseq
    %v368 = vshrl.u32 %v367, 7
    %v369 = vsub.s32 1, %v368
    %v370 = vrot.slane %v361, %v369
    %v389 = vunpack.c.l.b16 %v345
    %v390 = vunpack.c.h.b16 %v345
    %v391 = vunpack.c.l.b16 %v346
    %v392 = vunpack.c.h.b16 %v346
    %v393 = vunpack.c.l.b16 %v347
    %v394 = vunpack.c.h.b16 %v347
    %v395 = vunpack.c.l.b16 %v348
    %v396 = vunpack.c.h.b16 %v348
    %v397 = vunpack.c.l.b16 %v349
    %v398 = vunpack.c.h.b16 %v349
    %v399 = vunpack.c.l.b16 %v350
    %v400 = vunpack.c.h.b16 %v350
    %v401 = vunpack.c.l.b16 %v351
    %v402 = vunpack.c.h.b16 %v351
    %v403 = vunpack.c.l.b16 %v352
    %v404 = vunpack.c.h.b16 %v352
    %v405 = vunpack.c.l.b16 %v353
    %v406 = vunpack.c.h.b16 %v353
    %v407 = vunpack.c.l.b16 %v354
    %v408 = vunpack.c.h.b16 %v354
    %v409 = vunpack.c.l.b16 %v355
    %v410 = vunpack.c.h.b16 %v355
    %v411 = vunpack.c.l.b16 %v356
    %v412 = vunpack.c.h.b16 %v356
    %v413 = vunpack.c.l.b16 %v357
    %v414 = vunpack.c.h.b16 %v357
    %v415 = vunpack.c.l.b16 %v358
    %v416 = vunpack.c.h.b16 %v358
    %v417 = vunpack.c.l.b16 %v359
    %v418 = vunpack.c.h.b16 %v359
    %v419 = vunpack.c.l.b16 %v360
    %v420 = vunpack.c.h.b16 %v360
    %v421 = vpack.c.b16 %v391, %v389
    %v422 = vpack.c.b16 %v392, %v390
    %v423 = vpack.c.b16 %v395, %v393
    %v424 = vpack.c.b16 %v396, %v394
    %v425 = vpack.c.b16 %v399, %v397
    %v426 = vpack.c.b16 %v400, %v398
    %v427 = vpack.c.b16 %v403, %v401
    %v428 = vpack.c.b16 %v404, %v402
    %v429 = vpack.c.b16 %v407, %v405
    %v430 = vpack.c.b16 %v408, %v406
    %v431 = vpack.c.b16 %v411, %v409
    %v432 = vpack.c.b16 %v412, %v410
    %v433 = vpack.c.b16 %v415, %v413
    %v434 = vpack.c.b16 %v416, %v414
    %v435 = vpack.c.b16 %v419, %v417
    %v436 = vpack.c.b16 %v420, %v418
    %453 = vmatprep.subr.bf16.mxu0 %v436
    %454 = vmatpush1.bf16.msra.mxu0 %v435
    %455 = vmatprep.subr.bf16.mxu0 %v434
    %456 = vmatpush1.bf16.msra.mxu0 %v433
    %457 = vmatprep.subr.bf16.mxu0 %v432
    %458 = vmatpush1.bf16.msra.mxu0 %v431
    %459 = vmatprep.subr.bf16.mxu0 %v430
    %460 = vmatpush1.bf16.msra.mxu0 %v429
    %461 = vmatprep.subr.bf16.mxu0 %v428
    %462 = vmatpush1.bf16.msra.mxu0 %v427
    %463 = vmatprep.subr.bf16.mxu0 %v426
    %464 = vmatpush1.bf16.msra.mxu0 %v425
    %465 = vmatprep.subr.bf16.mxu0 %v424
    %466 = vmatpush1.bf16.msra.mxu0 %v423
    %467 = vmatprep.subr.bf16.mxu0 %v422
    %468 = vmatpush1.bf16.msra.mxu0 %v421
    %469 = vmatprep.subr.bf16.mxu0 0
    %470 = vmatpush2.bf16.msra.mxu0 0
    %471 = vmatprep.subr.bf16.mxu0 0
    %472 = vmatpush2.bf16.msra.mxu0 0
    %473 = vmatprep.subr.bf16.mxu0 0
    %474 = vmatpush2.bf16.msra.mxu0 0
    %475 = vmatprep.subr.bf16.mxu0 0
    %476 = vmatpush2.bf16.msra.mxu0 0
    %477 = vmatprep.subr.bf16.mxu0 0
    %478 = vmatpush2.bf16.msra.mxu0 0
    %479 = vmatprep.subr.bf16.mxu0 0
    %480 = vmatpush2.bf16.msra.mxu0 0
    %481 = vmatprep.subr.bf16.mxu0 0
    %482 = vmatpush2.bf16.msra.mxu0 0
    %483 = vmatprep.subr.bf16.mxu0 0
    %484 = vmatpush2.bf16.msra.mxu0 0
    %485 = vmatprep.mubr.bf16.mxu0 0
    %486 = vmatmul.mubr.bf16.gmra.mxu0 %v344
    %v487 = vpop.f32.mrf.mxu0
    %v488 = vadd.f32 %v366, %v487
    %v489 = vpop.f32.mrf.mxu0
    %v490 = vadd.f32 %v370, %v489
    %v491 = vpop.f32.mrf.mxu0
    %v492 = vpop.f32.mrf.mxu0
    %493 = vdwg.mxu0
    %v494 = vmax.f32 %v488, 0.0
    %v495 = vmax.f32 %v490, 0.0
    %v496 = vpack.c.bf16 %v494, %v494
    %v497 = vpack.c.bf16 %v495, %v495
    %v498 = vld [vmem:[#allocation11] sm:$0xff]
    %v499 = vld [vmem:[#allocation11 + $0x8] sm:$0xff]
    %v500 = vld [vmem:[#allocation11 + $0x10] sm:$0xff]
    %v501 = vld [vmem:[#allocation11 + $0x18] sm:$0xff]
    %v502 = vld [vmem:[#allocation11 + $0x20] sm:$0xff]
    %v503 = vld [vmem:[#allocation11 + $0x28] sm:$0xff]
    %v504 = vld [vmem:[#allocation11 + $0x30] sm:$0xff]
    %v505 = vld [vmem:[#allocation11 + $0x38] sm:$0xff]
    %v506 = vld [vmem:[#allocation11 + $0x40] sm:$0xff]
    %v507 = vld [vmem:[#allocation11 + $0x48] sm:$0xff]
    %v508 = vld [vmem:[#allocation11 + $0x50] sm:$0xff]
    %v509 = vld [vmem:[#allocation11 + $0x58] sm:$0xff]
    %v510 = vld [vmem:[#allocation11 + $0x60] sm:$0xff]
    %v511 = vld [vmem:[#allocation11 + $0x68] sm:$0xff]
    %v512 = vld [vmem:[#allocation11 + $0x70] sm:$0xff]
    %v513 = vld [vmem:[#allocation11 + $0x78] sm:$0xff]
    %v514 = vld [vmem:[#allocation11 + $0x80] sm:$0xff]
    %v515 = vld [vmem:[#allocation11 + $0x88] sm:$0xff]
    %v516 = vld [vmem:[#allocation11 + $0x90] sm:$0xff]
    %v517 = vld [vmem:[#allocation11 + $0x98] sm:$0xff]
    %v518 = vld [vmem:[#allocation11 + $0xa0] sm:$0xff]
    %v519 = vld [vmem:[#allocation11 + $0xa8] sm:$0xff]
    %v520 = vld [vmem:[#allocation11 + $0xb0] sm:$0xff]
    %v521 = vld [vmem:[#allocation11 + $0xb8] sm:$0xff]
    %v522 = vld [vmem:[#allocation11 + $0xc0] sm:$0xff]
    %v523 = vld [vmem:[#allocation11 + $0xc8] sm:$0xff]
    %v524 = vld [vmem:[#allocation11 + $0xd0] sm:$0xff]
    %v525 = vld [vmem:[#allocation11 + $0xd8] sm:$0xff]
    %v526 = vld [vmem:[#allocation11 + $0xe0] sm:$0xff]
    %v527 = vld [vmem:[#allocation11 + $0xe8] sm:$0xff]
    %v528 = vld [vmem:[#allocation11 + $0xf0] sm:$0xff]
    %v529 = vld [vmem:[#allocation11 + $0xf8] sm:$0xff]
    %v530 = vld [vmem:[#allocation11 + $0x100] sm:$0xff]
    %v531 = vld [vmem:[#allocation11 + $0x108] sm:$0xff]
    %v532 = vld [vmem:[#allocation11 + $0x110] sm:$0xff]
    %v533 = vld [vmem:[#allocation11 + $0x118] sm:$0xff]
    %v534 = vld [vmem:[#allocation11 + $0x120] sm:$0xff]
    %v535 = vld [vmem:[#allocation11 + $0x128] sm:$0xff]
    %v536 = vld [vmem:[#allocation11 + $0x130] sm:$0xff]
    %v537 = vld [vmem:[#allocation11 + $0x138] sm:$0xff]
    %v538 = vld [vmem:[#allocation11 + $0x140] sm:$0xff]
    %v539 = vld [vmem:[#allocation11 + $0x148] sm:$0xff]
    %v540 = vld [vmem:[#allocation11 + $0x150] sm:$0xff]
    %v541 = vld [vmem:[#allocation11 + $0x158] sm:$0xff]
    %v542 = vld [vmem:[#allocation11 + $0x160] sm:$0xff]
    %v543 = vld [vmem:[#allocation11 + $0x168] sm:$0xff]
    %v544 = vld [vmem:[#allocation11 + $0x170] sm:$0xff]
    %v545 = vld [vmem:[#allocation11 + $0x178] sm:$0xff]
    %v546 = vld [vmem:[#allocation11 + $0x180] sm:$0xff]
    %v547 = vld [vmem:[#allocation11 + $0x188] sm:$0xff]
    %v548 = vld [vmem:[#allocation11 + $0x190] sm:$0xff]
    %v549 = vld [vmem:[#allocation11 + $0x198] sm:$0xff]
    %v550 = vld [vmem:[#allocation11 + $0x1a0] sm:$0xff]
    %v551 = vld [vmem:[#allocation11 + $0x1a8] sm:$0xff]
    %v552 = vld [vmem:[#allocation11 + $0x1b0] sm:$0xff]
    %v553 = vld [vmem:[#allocation11 + $0x1b8] sm:$0xff]
    %v554 = vld [vmem:[#allocation11 + $0x1c0] sm:$0xff]
    %v555 = vld [vmem:[#allocation11 + $0x1c8] sm:$0xff]
    %v556 = vld [vmem:[#allocation11 + $0x1d0] sm:$0xff]
    %v557 = vld [vmem:[#allocation11 + $0x1d8] sm:$0xff]
    %v558 = vld [vmem:[#allocation11 + $0x1e0] sm:$0xff]
    %v559 = vld [vmem:[#allocation11 + $0x1e8] sm:$0xff]
    %v560 = vld [vmem:[#allocation11 + $0x1f0] sm:$0xff]
    %v561 = vld [vmem:[#allocation11 + $0x1f8] sm:$0xff]
    %v562 = vld [vmem:[%s8] sm:$0xf]
    %v564 = vlaneseq
    %v565 = vshrl.u32 %v564, 7
    %v566 = vsub.s32 0, %v565
    %v567 = vrot.slane %v562, %v566
    %v568 = vlaneseq
    %v569 = vshrl.u32 %v568, 7
    %v570 = vsub.s32 1, %v569
    %v571 = vrot.slane %v562, %v570
    %v572 = vlaneseq
    %v573 = vshrl.u32 %v572, 7
    %v574 = vsub.s32 2, %v573
    %v575 = vrot.slane %v562, %v574
    %v576 = vlaneseq
    %v577 = vshrl.u32 %v576, 7
    %v578 = vsub.s32 3, %v577
    %v579 = vrot.slane %v562, %v578
    %v648 = vunpack.c.l.b16 %v498
    %v649 = vunpack.c.h.b16 %v498
    %v650 = vunpack.c.l.b16 %v499
    %v651 = vunpack.c.h.b16 %v499
    %v652 = vunpack.c.l.b16 %v500
    %v653 = vunpack.c.h.b16 %v500
    %v654 = vunpack.c.l.b16 %v501
    %v655 = vunpack.c.h.b16 %v501
    %v656 = vunpack.c.l.b16 %v502
    %v657 = vunpack.c.h.b16 %v502
    %v658 = vunpack.c.l.b16 %v503
    %v659 = vunpack.c.h.b16 %v503
    %v660 = vunpack.c.l.b16 %v504
    %v661 = vunpack.c.h.b16 %v504
    %v662 = vunpack.c.l.b16 %v505
    %v663 = vunpack.c.h.b16 %v505
    %v664 = vunpack.c.l.b16 %v506
    %v665 = vunpack.c.h.b16 %v506
    %v666 = vunpack.c.l.b16 %v507
    %v667 = vunpack.c.h.b16 %v507
    %v668 = vunpack.c.l.b16 %v508
    %v669 = vunpack.c.h.b16 %v508
    %v670 = vunpack.c.l.b16 %v509
    %v671 = vunpack.c.h.b16 %v509
    %v672 = vunpack.c.l.b16 %v510
    %v673 = vunpack.c.h.b16 %v510
    %v674 = vunpack.c.l.b16 %v511
    %v675 = vunpack.c.h.b16 %v511
    %v676 = vunpack.c.l.b16 %v512
    %v677 = vunpack.c.h.b16 %v512
    %v678 = vunpack.c.l.b16 %v513
    %v679 = vunpack.c.h.b16 %v513
    %v680 = vunpack.c.l.b16 %v514
    %v681 = vunpack.c.h.b16 %v514
    %v682 = vunpack.c.l.b16 %v515
    %v683 = vunpack.c.h.b16 %v515
    %v684 = vunpack.c.l.b16 %v516
    %v685 = vunpack.c.h.b16 %v516
    %v686 = vunpack.c.l.b16 %v517
    %v687 = vunpack.c.h.b16 %v517
    %v688 = vunpack.c.l.b16 %v518
    %v689 = vunpack.c.h.b16 %v518
    %v690 = vunpack.c.l.b16 %v519
    %v691 = vunpack.c.h.b16 %v519
    %v692 = vunpack.c.l.b16 %v520
    %v693 = vunpack.c.h.b16 %v520
    %v694 = vunpack.c.l.b16 %v521
    %v695 = vunpack.c.h.b16 %v521
    %v696 = vunpack.c.l.b16 %v522
    %v697 = vunpack.c.h.b16 %v522
    %v698 = vunpack.c.l.b16 %v523
    %v699 = vunpack.c.h.b16 %v523
    %v700 = vunpack.c.l.b16 %v524
    %v701 = vunpack.c.h.b16 %v524
    %v702 = vunpack.c.l.b16 %v525
    %v703 = vunpack.c.h.b16 %v525
    %v704 = vunpack.c.l.b16 %v526
    %v705 = vunpack.c.h.b16 %v526
    %v706 = vunpack.c.l.b16 %v527
    %v707 = vunpack.c.h.b16 %v527
    %v708 = vunpack.c.l.b16 %v528
    %v709 = vunpack.c.h.b16 %v528
    %v710 = vunpack.c.l.b16 %v529
    %v711 = vunpack.c.h.b16 %v529
    %v712 = vunpack.c.l.b16 %v530
    %v713 = vunpack.c.h.b16 %v530
    %v714 = vunpack.c.l.b16 %v531
    %v715 = vunpack.c.h.b16 %v531
    %v716 = vunpack.c.l.b16 %v532
    %v717 = vunpack.c.h.b16 %v532
    %v718 = vunpack.c.l.b16 %v533
    %v719 = vunpack.c.h.b16 %v533
    %v720 = vunpack.c.l.b16 %v534
    %v721 = vunpack.c.h.b16 %v534
    %v722 = vunpack.c.l.b16 %v535
    %v723 = vunpack.c.h.b16 %v535
    %v724 = vunpack.c.l.b16 %v536
    %v725 = vunpack.c.h.b16 %v536
    %v726 = vunpack.c.l.b16 %v537
    %v727 = vunpack.c.h.b16 %v537
    %v728 = vunpack.c.l.b16 %v538
    %v729 = vunpack.c.h.b16 %v538
    %v730 = vunpack.c.l.b16 %v539
    %v731 = vunpack.c.h.b16 %v539
    %v732 = vunpack.c.l.b16 %v540
    %v733 = vunpack.c.h.b16 %v540
    %v734 = vunpack.c.l.b16 %v541
    %v735 = vunpack.c.h.b16 %v541
    %v736 = vunpack.c.l.b16 %v542
    %v737 = vunpack.c.h.b16 %v542
    %v738 = vunpack.c.l.b16 %v543
    %v739 = vunpack.c.h.b16 %v543
    %v740 = vunpack.c.l.b16 %v544
    %v741 = vunpack.c.h.b16 %v544
    %v742 = vunpack.c.l.b16 %v545
    %v743 = vunpack.c.h.b16 %v545
    %v744 = vunpack.c.l.b16 %v546
    %v745 = vunpack.c.h.b16 %v546
    %v746 = vunpack.c.l.b16 %v547
    %v747 = vunpack.c.h.b16 %v547
    %v748 = vunpack.c.l.b16 %v548
    %v749 = vunpack.c.h.b16 %v548
    %v750 = vunpack.c.l.b16 %v549
    %v751 = vunpack.c.h.b16 %v549
    %v752 = vunpack.c.l.b16 %v550
    %v753 = vunpack.c.h.b16 %v550
    %v754 = vunpack.c.l.b16 %v551
    %v755 = vunpack.c.h.b16 %v551
    %v756 = vunpack.c.l.b16 %v552
    %v757 = vunpack.c.h.b16 %v552
    %v758 = vunpack.c.l.b16 %v553
    %v759 = vunpack.c.h.b16 %v553
    %v760 = vunpack.c.l.b16 %v554
    %v761 = vunpack.c.h.b16 %v554
    %v762 = vunpack.c.l.b16 %v555
    %v763 = vunpack.c.h.b16 %v555
    %v764 = vunpack.c.l.b16 %v556
    %v765 = vunpack.c.h.b16 %v556
    %v766 = vunpack.c.l.b16 %v557
    %v767 = vunpack.c.h.b16 %v557
    %v768 = vunpack.c.l.b16 %v558
    %v769 = vunpack.c.h.b16 %v558
    %v770 = vunpack.c.l.b16 %v559
    %v771 = vunpack.c.h.b16 %v559
    %v772 = vunpack.c.l.b16 %v560
    %v773 = vunpack.c.h.b16 %v560
    %v774 = vunpack.c.l.b16 %v561
    %v775 = vunpack.c.h.b16 %v561
    %v776 = vpack.c.b16 %v652, %v648
    %v777 = vpack.c.b16 %v653, %v649
    %v778 = vpack.c.b16 %v654, %v650
    %v779 = vpack.c.b16 %v655, %v651
    %v780 = vpack.c.b16 %v660, %v656
    %v781 = vpack.c.b16 %v661, %v657
    %v782 = vpack.c.b16 %v662, %v658
    %v783 = vpack.c.b16 %v663, %v659
    %v784 = vpack.c.b16 %v668, %v664
    %v785 = vpack.c.b16 %v669, %v665
    %v786 = vpack.c.b16 %v670, %v666
    %v787 = vpack.c.b16 %v671, %v667
    %v788 = vpack.c.b16 %v676, %v672
    %v789 = vpack.c.b16 %v677, %v673
    %v790 = vpack.c.b16 %v678, %v674
    %v791 = vpack.c.b16 %v679, %v675
    %v792 = vpack.c.b16 %v684, %v680
    %v793 = vpack.c.b16 %v685, %v681
    %v794 = vpack.c.b16 %v686, %v682
    %v795 = vpack.c.b16 %v687, %v683
    %v796 = vpack.c.b16 %v692, %v688
    %v797 = vpack.c.b16 %v693, %v689
    %v798 = vpack.c.b16 %v694, %v690
    %v799 = vpack.c.b16 %v695, %v691
    %v800 = vpack.c.b16 %v700, %v696
    %v801 = vpack.c.b16 %v701, %v697
    %v802 = vpack.c.b16 %v702, %v698
    %v803 = vpack.c.b16 %v703, %v699
    %v804 = vpack.c.b16 %v708, %v704
    %v805 = vpack.c.b16 %v709, %v705
    %v806 = vpack.c.b16 %v710, %v706
    %v807 = vpack.c.b16 %v711, %v707
    %v808 = vpack.c.b16 %v716, %v712
    %v809 = vpack.c.b16 %v717, %v713
    %v810 = vpack.c.b16 %v718, %v714
    %v811 = vpack.c.b16 %v719, %v715
    %v812 = vpack.c.b16 %v724, %v720
    %v813 = vpack.c.b16 %v725, %v721
    %v814 = vpack.c.b16 %v726, %v722
    %v815 = vpack.c.b16 %v727, %v723
    %v816 = vpack.c.b16 %v732, %v728
    %v817 = vpack.c.b16 %v733, %v729
    %v818 = vpack.c.b16 %v734, %v730
    %v819 = vpack.c.b16 %v735, %v731
    %v820 = vpack.c.b16 %v740, %v736
    %v821 = vpack.c.b16 %v741, %v737
    %v822 = vpack.c.b16 %v742, %v738
    %v823 = vpack.c.b16 %v743, %v739
    %v824 = vpack.c.b16 %v748, %v744
    %v825 = vpack.c.b16 %v749, %v745
    %v826 = vpack.c.b16 %v750, %v746
    %v827 = vpack.c.b16 %v751, %v747
    %v828 = vpack.c.b16 %v756, %v752
    %v829 = vpack.c.b16 %v757, %v753
    %v830 = vpack.c.b16 %v758, %v754
    %v831 = vpack.c.b16 %v759, %v755
    %v832 = vpack.c.b16 %v764, %v760
    %v833 = vpack.c.b16 %v765, %v761
    %v834 = vpack.c.b16 %v766, %v762
    %v835 = vpack.c.b16 %v767, %v763
    %v836 = vpack.c.b16 %v772, %v768
    %v837 = vpack.c.b16 %v773, %v769
    %v838 = vpack.c.b16 %v774, %v770
    %v839 = vpack.c.b16 %v775, %v771
    %904 = vmatprep.subr.bf16.mxu0 %v805
    %905 = vmatpush1.bf16.msra.mxu0 %v804
    %906 = vmatprep.subr.bf16.mxu0 %v801
    %907 = vmatpush1.bf16.msra.mxu0 %v800
    %908 = vmatprep.subr.bf16.mxu0 %v797
    %909 = vmatpush1.bf16.msra.mxu0 %v796
    %910 = vmatprep.subr.bf16.mxu0 %v793
    %911 = vmatpush1.bf16.msra.mxu0 %v792
    %912 = vmatprep.subr.bf16.mxu0 %v789
    %913 = vmatpush1.bf16.msra.mxu0 %v788
    %914 = vmatprep.subr.bf16.mxu0 %v785
    %915 = vmatpush1.bf16.msra.mxu0 %v784
    %916 = vmatprep.subr.bf16.mxu0 %v781
    %917 = vmatpush1.bf16.msra.mxu0 %v780
    %918 = vmatprep.subr.bf16.mxu0 %v777
    %919 = vmatpush1.bf16.msra.mxu0 %v776
    %920 = vmatprep.subr.bf16.mxu0 %v837
    %921 = vmatpush2.bf16.msra.mxu0 %v836
    %922 = vmatprep.subr.bf16.mxu0 %v833
    %923 = vmatpush2.bf16.msra.mxu0 %v832
    %924 = vmatprep.subr.bf16.mxu0 %v829
    %925 = vmatpush2.bf16.msra.mxu0 %v828
    %926 = vmatprep.subr.bf16.mxu0 %v825
    %927 = vmatpush2.bf16.msra.mxu0 %v824
    %928 = vmatprep.subr.bf16.mxu0 %v821
    %929 = vmatpush2.bf16.msra.mxu0 %v820
    %930 = vmatprep.subr.bf16.mxu0 %v817
    %931 = vmatpush2.bf16.msra.mxu0 %v816
    %932 = vmatprep.subr.bf16.mxu0 %v813
    %933 = vmatpush2.bf16.msra.mxu0 %v812
    %934 = vmatprep.subr.bf16.mxu0 %v809
    %935 = vmatpush2.bf16.msra.mxu0 %v808
    %936 = vmatprep.mubr.bf16.mxu0 %v497
    %937 = vmatmul.mubr.bf16.gmra.mxu0 %v496
    %v938 = vpop.f32.mrf.mxu0
    %v939 = vadd.f32 %v567, %v938
    %v940 = vpop.f32.mrf.mxu0
    %v941 = vadd.f32 %v571, %v940
    %v942 = vpop.f32.mrf.mxu0
    %v943 = vpop.f32.mrf.mxu0
    %944 = vdwg.mxu0
    %945 = vmatprep.subr.bf16.mxu0 %v807
    %946 = vmatpush1.bf16.msra.mxu0 %v806
    %947 = vmatprep.subr.bf16.mxu0 %v803
    %948 = vmatpush1.bf16.msra.mxu0 %v802
    %949 = vmatprep.subr.bf16.mxu0 %v799
    %950 = vmatpush1.bf16.msra.mxu0 %v798
    %951 = vmatprep.subr.bf16.mxu0 %v795
    %952 = vmatpush1.bf16.msra.mxu0 %v794
    %953 = vmatprep.subr.bf16.mxu0 %v791
    %954 = vmatpush1.bf16.msra.mxu0 %v790
    %955 = vmatprep.subr.bf16.mxu0 %v787
    %956 = vmatpush1.bf16.msra.mxu0 %v786
    %957 = vmatprep.subr.bf16.mxu0 %v783
    %958 = vmatpush1.bf16.msra.mxu0 %v782
    %959 = vmatprep.subr.bf16.mxu0 %v779
    %960 = vmatpush1.bf16.msra.mxu0 %v778
    %961 = vmatprep.subr.bf16.mxu0 %v839
    %962 = vmatpush2.bf16.msra.mxu0 %v838
    %963 = vmatprep.subr.bf16.mxu0 %v835
    %964 = vmatpush2.bf16.msra.mxu0 %v834
    %965 = vmatprep.subr.bf16.mxu0 %v831
    %966 = vmatpush2.bf16.msra.mxu0 %v830
    %967 = vmatprep.subr.bf16.mxu0 %v827
    %968 = vmatpush2.bf16.msra.mxu0 %v826
    %969 = vmatprep.subr.bf16.mxu0 %v823
    %970 = vmatpush2.bf16.msra.mxu0 %v822
    %971 = vmatprep.subr.bf16.mxu0 %v819
    %972 = vmatpush2.bf16.msra.mxu0 %v818
    %973 = vmatprep.subr.bf16.mxu0 %v815
    %974 = vmatpush2.bf16.msra.mxu0 %v814
    %975 = vmatprep.subr.bf16.mxu0 %v811
    %976 = vmatpush2.bf16.msra.mxu0 %v810
    %977 = vmatprep.mubr.bf16.mxu0 %v497
    %978 = vmatmul.mubr.bf16.gmra.mxu0 %v496
    %v979 = vpop.f32.mrf.mxu0
    %v980 = vadd.f32 %v575, %v979
    %v981 = vpop.f32.mrf.mxu0
    %v982 = vadd.f32 %v579, %v981
    %v983 = vpop.f32.mrf.mxu0
    %v984 = vpop.f32.mrf.mxu0
    %985 = vdwg.mxu0
    %v986 = vmax.f32 %v939, 0.0
    %v987 = vmax.f32 %v941, 0.0
    %v988 = vmax.f32 %v980, 0.0
    %v989 = vmax.f32 %v982, 0.0
    %v990 = vpack.c.bf16 %v986, %v986
    %v991 = vpack.c.bf16 %v987, %v987
    %v992 = vpack.c.bf16 %v988, %v988
    %v993 = vpack.c.bf16 %v989, %v989
    %v994 = vld [vmem:[#allocation13] sm:$0xff]
    %v995 = vld [vmem:[#allocation13 + $0x8] sm:$0xff]
    %v996 = vld [vmem:[#allocation13 + $0x10] sm:$0xff]
    %v997 = vld [vmem:[#allocation13 + $0x18] sm:$0xff]
    %v998 = vld [vmem:[#allocation13 + $0x20] sm:$0xff]
    %v999 = vld [vmem:[#allocation13 + $0x28] sm:$0xff]
    %v1000 = vld [vmem:[#allocation13 + $0x30] sm:$0xff]
    %v1001 = vld [vmem:[#allocation13 + $0x38] sm:$0xff]
    %v1002 = vld [vmem:[#allocation13 + $0x40] sm:$0xff]
    %v1003 = vld [vmem:[#allocation13 + $0x48] sm:$0xff]
    %v1004 = vld [vmem:[#allocation13 + $0x50] sm:$0xff]
    %v1005 = vld [vmem:[#allocation13 + $0x58] sm:$0xff]
    %v1006 = vld [vmem:[#allocation13 + $0x60] sm:$0xff]
    %v1007 = vld [vmem:[#allocation13 + $0x68] sm:$0xff]
    %v1008 = vld [vmem:[#allocation13 + $0x70] sm:$0xff]
    %v1009 = vld [vmem:[#allocation13 + $0x78] sm:$0xff]
    %v1010 = vld [vmem:[#allocation13 + $0x80] sm:$0xff]
    %v1011 = vld [vmem:[#allocation13 + $0x88] sm:$0xff]
    %v1012 = vld [vmem:[#allocation13 + $0x90] sm:$0xff]
    %v1013 = vld [vmem:[#allocation13 + $0x98] sm:$0xff]
    %v1014 = vld [vmem:[#allocation13 + $0xa0] sm:$0xff]
    %v1015 = vld [vmem:[#allocation13 + $0xa8] sm:$0xff]
    %v1016 = vld [vmem:[#allocation13 + $0xb0] sm:$0xff]
    %v1017 = vld [vmem:[#allocation13 + $0xb8] sm:$0xff]
    %v1018 = vld [vmem:[#allocation13 + $0xc0] sm:$0xff]
    %v1019 = vld [vmem:[#allocation13 + $0xc8] sm:$0xff]
    %v1020 = vld [vmem:[#allocation13 + $0xd0] sm:$0xff]
    %v1021 = vld [vmem:[#allocation13 + $0xd8] sm:$0xff]
    %v1022 = vld [vmem:[#allocation13 + $0xe0] sm:$0xff]
    %v1023 = vld [vmem:[#allocation13 + $0xe8] sm:$0xff]
    %v1024 = vld [vmem:[#allocation13 + $0xf0] sm:$0xff]
    %v1025 = vld [vmem:[#allocation13 + $0xf8] sm:$0xff]
    %v1026 = vld [vmem:[#allocation13 + $0x100] sm:$0xff]
    %v1027 = vld [vmem:[#allocation13 + $0x108] sm:$0xff]
    %v1028 = vld [vmem:[#allocation13 + $0x110] sm:$0xff]
    %v1029 = vld [vmem:[#allocation13 + $0x118] sm:$0xff]
    %v1030 = vld [vmem:[#allocation13 + $0x120] sm:$0xff]
    %v1031 = vld [vmem:[#allocation13 + $0x128] sm:$0xff]
    %v1032 = vld [vmem:[#allocation13 + $0x130] sm:$0xff]
    %v1033 = vld [vmem:[#allocation13 + $0x138] sm:$0xff]
    %v1034 = vld [vmem:[#allocation13 + $0x140] sm:$0xff]
    %v1035 = vld [vmem:[#allocation13 + $0x148] sm:$0xff]
    %v1036 = vld [vmem:[#allocation13 + $0x150] sm:$0xff]
    %v1037 = vld [vmem:[#allocation13 + $0x158] sm:$0xff]
    %v1038 = vld [vmem:[#allocation13 + $0x160] sm:$0xff]
    %v1039 = vld [vmem:[#allocation13 + $0x168] sm:$0xff]
    %v1040 = vld [vmem:[#allocation13 + $0x170] sm:$0xff]
    %v1041 = vld [vmem:[#allocation13 + $0x178] sm:$0xff]
    %v1042 = vld [vmem:[#allocation13 + $0x180] sm:$0xff]
    %v1043 = vld [vmem:[#allocation13 + $0x188] sm:$0xff]
    %v1044 = vld [vmem:[#allocation13 + $0x190] sm:$0xff]
    %v1045 = vld [vmem:[#allocation13 + $0x198] sm:$0xff]
    %v1046 = vld [vmem:[#allocation13 + $0x1a0] sm:$0xff]
    %v1047 = vld [vmem:[#allocation13 + $0x1a8] sm:$0xff]
    %v1048 = vld [vmem:[#allocation13 + $0x1b0] sm:$0xff]
    %v1049 = vld [vmem:[#allocation13 + $0x1b8] sm:$0xff]
    %v1050 = vld [vmem:[#allocation13 + $0x1c0] sm:$0xff]
    %v1051 = vld [vmem:[#allocation13 + $0x1c8] sm:$0xff]
    %v1052 = vld [vmem:[#allocation13 + $0x1d0] sm:$0xff]
    %v1053 = vld [vmem:[#allocation13 + $0x1d8] sm:$0xff]
    %v1054 = vld [vmem:[#allocation13 + $0x1e0] sm:$0xff]
    %v1055 = vld [vmem:[#allocation13 + $0x1e8] sm:$0xff]
    %v1056 = vld [vmem:[#allocation13 + $0x1f0] sm:$0xff]
    %v1057 = vld [vmem:[#allocation13 + $0x1f8] sm:$0xff]
    %v1058 = vld [vmem:[%s10] sm:$0x3]
    %v1060 = vlaneseq
    %v1061 = vshrl.u32 %v1060, 7
    %v1062 = vsub.s32 0, %v1061
    %v1063 = vrot.slane %v1058, %v1062
    %v1064 = vlaneseq
    %v1065 = vshrl.u32 %v1064, 7
    %v1066 = vsub.s32 1, %v1065
    %v1067 = vrot.slane %v1058, %v1066
    %v1134 = vunpack.c.l.b16 %v994
    %v1135 = vunpack.c.h.b16 %v994
    %v1136 = vunpack.c.l.b16 %v995
    %v1137 = vunpack.c.h.b16 %v995
    %v1138 = vunpack.c.l.b16 %v996
    %v1139 = vunpack.c.h.b16 %v996
    %v1140 = vunpack.c.l.b16 %v997
    %v1141 = vunpack.c.h.b16 %v997
    %v1142 = vunpack.c.l.b16 %v998
    %v1143 = vunpack.c.h.b16 %v998
    %v1144 = vunpack.c.l.b16 %v999
    %v1145 = vunpack.c.h.b16 %v999
    %v1146 = vunpack.c.l.b16 %v1000
    %v1147 = vunpack.c.h.b16 %v1000
    %v1148 = vunpack.c.l.b16 %v1001
    %v1149 = vunpack.c.h.b16 %v1001
    %v1150 = vunpack.c.l.b16 %v1002
    %v1151 = vunpack.c.h.b16 %v1002
    %v1152 = vunpack.c.l.b16 %v1003
    %v1153 = vunpack.c.h.b16 %v1003
    %v1154 = vunpack.c.l.b16 %v1004
    %v1155 = vunpack.c.h.b16 %v1004
    %v1156 = vunpack.c.l.b16 %v1005
    %v1157 = vunpack.c.h.b16 %v1005
    %v1158 = vunpack.c.l.b16 %v1006
    %v1159 = vunpack.c.h.b16 %v1006
    %v1160 = vunpack.c.l.b16 %v1007
    %v1161 = vunpack.c.h.b16 %v1007
    %v1162 = vunpack.c.l.b16 %v1008
    %v1163 = vunpack.c.h.b16 %v1008
    %v1164 = vunpack.c.l.b16 %v1009
    %v1165 = vunpack.c.h.b16 %v1009
    %v1166 = vunpack.c.l.b16 %v1010
    %v1167 = vunpack.c.h.b16 %v1010
    %v1168 = vunpack.c.l.b16 %v1011
    %v1169 = vunpack.c.h.b16 %v1011
    %v1170 = vunpack.c.l.b16 %v1012
    %v1171 = vunpack.c.h.b16 %v1012
    %v1172 = vunpack.c.l.b16 %v1013
    %v1173 = vunpack.c.h.b16 %v1013
    %v1174 = vunpack.c.l.b16 %v1014
    %v1175 = vunpack.c.h.b16 %v1014
    %v1176 = vunpack.c.l.b16 %v1015
    %v1177 = vunpack.c.h.b16 %v1015
    %v1178 = vunpack.c.l.b16 %v1016
    %v1179 = vunpack.c.h.b16 %v1016
    %v1180 = vunpack.c.l.b16 %v1017
    %v1181 = vunpack.c.h.b16 %v1017
    %v1182 = vunpack.c.l.b16 %v1018
    %v1183 = vunpack.c.h.b16 %v1018
    %v1184 = vunpack.c.l.b16 %v1019
    %v1185 = vunpack.c.h.b16 %v1019
    %v1186 = vunpack.c.l.b16 %v1020
    %v1187 = vunpack.c.h.b16 %v1020
    %v1188 = vunpack.c.l.b16 %v1021
    %v1189 = vunpack.c.h.b16 %v1021
    %v1190 = vunpack.c.l.b16 %v1022
    %v1191 = vunpack.c.h.b16 %v1022
    %v1192 = vunpack.c.l.b16 %v1023
    %v1193 = vunpack.c.h.b16 %v1023
    %v1194 = vunpack.c.l.b16 %v1024
    %v1195 = vunpack.c.h.b16 %v1024
    %v1196 = vunpack.c.l.b16 %v1025
    %v1197 = vunpack.c.h.b16 %v1025
    %v1198 = vunpack.c.l.b16 %v1026
    %v1199 = vunpack.c.h.b16 %v1026
    %v1200 = vunpack.c.l.b16 %v1027
    %v1201 = vunpack.c.h.b16 %v1027
    %v1202 = vunpack.c.l.b16 %v1028
    %v1203 = vunpack.c.h.b16 %v1028
    %v1204 = vunpack.c.l.b16 %v1029
    %v1205 = vunpack.c.h.b16 %v1029
    %v1206 = vunpack.c.l.b16 %v1030
    %v1207 = vunpack.c.h.b16 %v1030
    %v1208 = vunpack.c.l.b16 %v1031
    %v1209 = vunpack.c.h.b16 %v1031
    %v1210 = vunpack.c.l.b16 %v1032
    %v1211 = vunpack.c.h.b16 %v1032
    %v1212 = vunpack.c.l.b16 %v1033
    %v1213 = vunpack.c.h.b16 %v1033
    %v1214 = vunpack.c.l.b16 %v1034
    %v1215 = vunpack.c.h.b16 %v1034
    %v1216 = vunpack.c.l.b16 %v1035
    %v1217 = vunpack.c.h.b16 %v1035
    %v1218 = vunpack.c.l.b16 %v1036
    %v1219 = vunpack.c.h.b16 %v1036
    %v1220 = vunpack.c.l.b16 %v1037
    %v1221 = vunpack.c.h.b16 %v1037
    %v1222 = vunpack.c.l.b16 %v1038
    %v1223 = vunpack.c.h.b16 %v1038
    %v1224 = vunpack.c.l.b16 %v1039
    %v1225 = vunpack.c.h.b16 %v1039
    %v1226 = vunpack.c.l.b16 %v1040
    %v1227 = vunpack.c.h.b16 %v1040
    %v1228 = vunpack.c.l.b16 %v1041
    %v1229 = vunpack.c.h.b16 %v1041
    %v1230 = vunpack.c.l.b16 %v1042
    %v1231 = vunpack.c.h.b16 %v1042
    %v1232 = vunpack.c.l.b16 %v1043
    %v1233 = vunpack.c.h.b16 %v1043
    %v1234 = vunpack.c.l.b16 %v1044
    %v1235 = vunpack.c.h.b16 %v1044
    %v1236 = vunpack.c.l.b16 %v1045
    %v1237 = vunpack.c.h.b16 %v1045
    %v1238 = vunpack.c.l.b16 %v1046
    %v1239 = vunpack.c.h.b16 %v1046
    %v1240 = vunpack.c.l.b16 %v1047
    %v1241 = vunpack.c.h.b16 %v1047
    %v1242 = vunpack.c.l.b16 %v1048
    %v1243 = vunpack.c.h.b16 %v1048
    %v1244 = vunpack.c.l.b16 %v1049
    %v1245 = vunpack.c.h.b16 %v1049
    %v1246 = vunpack.c.l.b16 %v1050
    %v1247 = vunpack.c.h.b16 %v1050
    %v1248 = vunpack.c.l.b16 %v1051
    %v1249 = vunpack.c.h.b16 %v1051
    %v1250 = vunpack.c.l.b16 %v1052
    %v1251 = vunpack.c.h.b16 %v1052
    %v1252 = vunpack.c.l.b16 %v1053
    %v1253 = vunpack.c.h.b16 %v1053
    %v1254 = vunpack.c.l.b16 %v1054
    %v1255 = vunpack.c.h.b16 %v1054
    %v1256 = vunpack.c.l.b16 %v1055
    %v1257 = vunpack.c.h.b16 %v1055
    %v1258 = vunpack.c.l.b16 %v1056
    %v1259 = vunpack.c.h.b16 %v1056
    %v1260 = vunpack.c.l.b16 %v1057
    %v1261 = vunpack.c.h.b16 %v1057
    %v1262 = vpack.c.b16 %v1136, %v1134
    %v1263 = vpack.c.b16 %v1137, %v1135
    %v1264 = vpack.c.b16 %v1140, %v1138
    %v1265 = vpack.c.b16 %v1141, %v1139
    %v1266 = vpack.c.b16 %v1144, %v1142
    %v1267 = vpack.c.b16 %v1145, %v1143
    %v1268 = vpack.c.b16 %v1148, %v1146
    %v1269 = vpack.c.b16 %v1149, %v1147
    %v1270 = vpack.c.b16 %v1152, %v1150
    %v1271 = vpack.c.b16 %v1153, %v1151
    %v1272 = vpack.c.b16 %v1156, %v1154
    %v1273 = vpack.c.b16 %v1157, %v1155
    %v1274 = vpack.c.b16 %v1160, %v1158
    %v1275 = vpack.c.b16 %v1161, %v1159
    %v1276 = vpack.c.b16 %v1164, %v1162
    %v1277 = vpack.c.b16 %v1165, %v1163
    %v1278 = vpack.c.b16 %v1168, %v1166
    %v1279 = vpack.c.b16 %v1169, %v1167
    %v1280 = vpack.c.b16 %v1172, %v1170
    %v1281 = vpack.c.b16 %v1173, %v1171
    %v1282 = vpack.c.b16 %v1176, %v1174
    %v1283 = vpack.c.b16 %v1177, %v1175
    %v1284 = vpack.c.b16 %v1180, %v1178
    %v1285 = vpack.c.b16 %v1181, %v1179
    %v1286 = vpack.c.b16 %v1184, %v1182
    %v1287 = vpack.c.b16 %v1185, %v1183
    %v1288 = vpack.c.b16 %v1188, %v1186
    %v1289 = vpack.c.b16 %v1189, %v1187
    %v1290 = vpack.c.b16 %v1192, %v1190
    %v1291 = vpack.c.b16 %v1193, %v1191
    %v1292 = vpack.c.b16 %v1196, %v1194
    %v1293 = vpack.c.b16 %v1197, %v1195
    %v1294 = vpack.c.b16 %v1200, %v1198
    %v1295 = vpack.c.b16 %v1201, %v1199
    %v1296 = vpack.c.b16 %v1204, %v1202
    %v1297 = vpack.c.b16 %v1205, %v1203
    %v1298 = vpack.c.b16 %v1208, %v1206
    %v1299 = vpack.c.b16 %v1209, %v1207
    %v1300 = vpack.c.b16 %v1212, %v1210
    %v1301 = vpack.c.b16 %v1213, %v1211
    %v1302 = vpack.c.b16 %v1216, %v1214
    %v1303 = vpack.c.b16 %v1217, %v1215
    %v1304 = vpack.c.b16 %v1220, %v1218
    %v1305 = vpack.c.b16 %v1221, %v1219
    %v1306 = vpack.c.b16 %v1224, %v1222
    %v1307 = vpack.c.b16 %v1225, %v1223
    %v1308 = vpack.c.b16 %v1228, %v1226
    %v1309 = vpack.c.b16 %v1229, %v1227
    %v1310 = vpack.c.b16 %v1232, %v1230
    %v1311 = vpack.c.b16 %v1233, %v1231
    %v1312 = vpack.c.b16 %v1236, %v1234
    %v1313 = vpack.c.b16 %v1237, %v1235
    %v1314 = vpack.c.b16 %v1240, %v1238
    %v1315 = vpack.c.b16 %v1241, %v1239
    %v1316 = vpack.c.b16 %v1244, %v1242
    %v1317 = vpack.c.b16 %v1245, %v1243
    %v1318 = vpack.c.b16 %v1248, %v1246
    %v1319 = vpack.c.b16 %v1249, %v1247
    %v1320 = vpack.c.b16 %v1252, %v1250
    %v1321 = vpack.c.b16 %v1253, %v1251
    %v1322 = vpack.c.b16 %v1256, %v1254
    %v1323 = vpack.c.b16 %v1257, %v1255
    %v1324 = vpack.c.b16 %v1260, %v1258
    %v1325 = vpack.c.b16 %v1261, %v1259
    %1390 = vmatprep.subr.bf16.mxu0 %v1277
    %1391 = vmatpush1.bf16.msra.mxu0 %v1276
    %1392 = vmatprep.subr.bf16.mxu0 %v1275
    %1393 = vmatpush1.bf16.msra.mxu0 %v1274
    %1394 = vmatprep.subr.bf16.mxu0 %v1273
    %1395 = vmatpush1.bf16.msra.mxu0 %v1272
    %1396 = vmatprep.subr.bf16.mxu0 %v1271
    %1397 = vmatpush1.bf16.msra.mxu0 %v1270
    %1398 = vmatprep.subr.bf16.mxu0 %v1269
    %1399 = vmatpush1.bf16.msra.mxu0 %v1268
    %1400 = vmatprep.subr.bf16.mxu0 %v1267
    %1401 = vmatpush1.bf16.msra.mxu0 %v1266
    %1402 = vmatprep.subr.bf16.mxu0 %v1265
    %1403 = vmatpush1.bf16.msra.mxu0 %v1264
    %1404 = vmatprep.subr.bf16.mxu0 %v1263
    %1405 = vmatpush1.bf16.msra.mxu0 %v1262
    %1406 = vmatprep.subr.bf16.mxu0 %v1293
    %1407 = vmatpush2.bf16.msra.mxu0 %v1292
    %1408 = vmatprep.subr.bf16.mxu0 %v1291
    %1409 = vmatpush2.bf16.msra.mxu0 %v1290
    %1410 = vmatprep.subr.bf16.mxu0 %v1289
    %1411 = vmatpush2.bf16.msra.mxu0 %v1288
    %1412 = vmatprep.subr.bf16.mxu0 %v1287
    %1413 = vmatpush2.bf16.msra.mxu0 %v1286
    %1414 = vmatprep.subr.bf16.mxu0 %v1285
    %1415 = vmatpush2.bf16.msra.mxu0 %v1284
    %1416 = vmatprep.subr.bf16.mxu0 %v1283
    %1417 = vmatpush2.bf16.msra.mxu0 %v1282
    %1418 = vmatprep.subr.bf16.mxu0 %v1281
    %1419 = vmatpush2.bf16.msra.mxu0 %v1280
    %1420 = vmatprep.subr.bf16.mxu0 %v1279
    %1421 = vmatpush2.bf16.msra.mxu0 %v1278
    %1422 = vmatprep.mubr.bf16.mxu0 %v991
    %1423 = vmatmul.mubr.bf16.gmra.mxu0 %v990
    %v1424 = vpop.f32.mrf.mxu0
    %v1425 = vadd.f32 %v1063, %v1424
    %v1426 = vpop.f32.mrf.mxu0
    %v1427 = vadd.f32 %v1067, %v1426
    %v1428 = vpop.f32.mrf.mxu0
    %v1429 = vpop.f32.mrf.mxu0
    %1430 = vdwg.mxu0
    %1431 = vmatprep.subr.bf16.mxu0 %v1309
    %1432 = vmatpush1.bf16.msra.mxu0 %v1308
    %1433 = vmatprep.subr.bf16.mxu0 %v1307
    %1434 = vmatpush1.bf16.msra.mxu0 %v1306
    %1435 = vmatprep.subr.bf16.mxu0 %v1305
    %1436 = vmatpush1.bf16.msra.mxu0 %v1304
    %1437 = vmatprep.subr.bf16.mxu0 %v1303
    %1438 = vmatpush1.bf16.msra.mxu0 %v1302
    %1439 = vmatprep.subr.bf16.mxu0 %v1301
    %1440 = vmatpush1.bf16.msra.mxu0 %v1300
    %1441 = vmatprep.subr.bf16.mxu0 %v1299
    %1442 = vmatpush1.bf16.msra.mxu0 %v1298
    %1443 = vmatprep.subr.bf16.mxu0 %v1297
    %1444 = vmatpush1.bf16.msra.mxu0 %v1296
    %1445 = vmatprep.subr.bf16.mxu0 %v1295
    %1446 = vmatpush1.bf16.msra.mxu0 %v1294
    %1447 = vmatprep.subr.bf16.mxu0 %v1325
    %1448 = vmatpush2.bf16.msra.mxu0 %v1324
    %1449 = vmatprep.subr.bf16.mxu0 %v1323
    %1450 = vmatpush2.bf16.msra.mxu0 %v1322
    %1451 = vmatprep.subr.bf16.mxu0 %v1321
    %1452 = vmatpush2.bf16.msra.mxu0 %v1320
    %1453 = vmatprep.subr.bf16.mxu0 %v1319
    %1454 = vmatpush2.bf16.msra.mxu0 %v1318
    %1455 = vmatprep.subr.bf16.mxu0 %v1317
    %1456 = vmatpush2.bf16.msra.mxu0 %v1316
    %1457 = vmatprep.subr.bf16.mxu0 %v1315
    %1458 = vmatpush2.bf16.msra.mxu0 %v1314
    %1459 = vmatprep.subr.bf16.mxu0 %v1313
    %1460 = vmatpush2.bf16.msra.mxu0 %v1312
    %1461 = vmatprep.subr.bf16.mxu0 %v1311
    %1462 = vmatpush2.bf16.msra.mxu0 %v1310
    %1463 = vmatprep.mubr.bf16.mxu0 %v993
    %1464 = vmatmul.mubr.bf16.gmra.mxu0 %v992
    %v1465 = vpop.f32.mrf.mxu0
    %v1466 = vadd.f32 %v1425, %v1465
    %v1467 = vpop.f32.mrf.mxu0
    %v1468 = vadd.f32 %v1427, %v1467
    %v1469 = vpop.f32.mrf.mxu0
    %v1470 = vpop.f32.mrf.mxu0
    %1471 = vdwg.mxu0
    %v1472 = vmax.f32 %v1466, 0.0
    %v1473 = vmax.f32 %v1468, 0.0
    %v1474 = vpack.c.bf16 %v1472, %v1472
    %v1475 = vpack.c.bf16 %v1473, %v1473
    %v1476 = vld [vmem:[#allocation14] sm:$0xf]
    %v1477 = vld [vmem:[#allocation14 + $0x4] sm:$0xf]
    %v1478 = vld [vmem:[#allocation14 + $0x8] sm:$0xf]
    %v1479 = vld [vmem:[#allocation14 + $0xc] sm:$0xf]
    %v1480 = vld [vmem:[#allocation14 + $0x10] sm:$0xf]
    %v1481 = vld [vmem:[#allocation14 + $0x14] sm:$0xf]
    %v1482 = vld [vmem:[#allocation14 + $0x18] sm:$0xf]
    %v1483 = vld [vmem:[#allocation14 + $0x1c] sm:$0xf]
    %v1484 = vld [vmem:[#allocation14 + $0x20] sm:$0xf]
    %v1485 = vld [vmem:[#allocation14 + $0x24] sm:$0xf]
    %v1486 = vld [vmem:[#allocation14 + $0x28] sm:$0xf]
    %v1487 = vld [vmem:[#allocation14 + $0x2c] sm:$0xf]
    %v1488 = vld [vmem:[#allocation14 + $0x30] sm:$0xf]
    %v1489 = vld [vmem:[#allocation14 + $0x34] sm:$0xf]
    %v1490 = vld [vmem:[#allocation14 + $0x38] sm:$0xf]
    %v1491 = vld [vmem:[#allocation14 + $0x3c] sm:$0xf]
    %v1492 = vld [vmem:[#allocation14 + $0x40] sm:$0xf]
    %v1493 = vld [vmem:[#allocation14 + $0x44] sm:$0xf]
    %v1494 = vld [vmem:[#allocation14 + $0x48] sm:$0xf]
    %v1495 = vld [vmem:[#allocation14 + $0x4c] sm:$0xf]
    %v1496 = vld [vmem:[#allocation14 + $0x50] sm:$0xf]
    %v1497 = vld [vmem:[#allocation14 + $0x54] sm:$0xf]
    %v1498 = vld [vmem:[#allocation14 + $0x58] sm:$0xf]
    %v1499 = vld [vmem:[#allocation14 + $0x5c] sm:$0xf]
    %v1500 = vld [vmem:[#allocation14 + $0x60] sm:$0xf]
    %v1501 = vld [vmem:[#allocation14 + $0x64] sm:$0xf]
    %v1502 = vld [vmem:[#allocation14 + $0x68] sm:$0xf]
    %v1503 = vld [vmem:[#allocation14 + $0x6c] sm:$0xf]
    %v1504 = vld [vmem:[#allocation14 + $0x70] sm:$0xf]
    %v1505 = vld [vmem:[#allocation14 + $0x74] sm:$0xf]
    %v1506 = vld [vmem:[#allocation14 + $0x78] sm:$0xf]
    %v1507 = vld [vmem:[#allocation14 + $0x7c] sm:$0xf]
    %v1508 = vld [vmem:[%s12] sm:$0x1]
    %v1510 = vlaneseq
    %v1511 = vshrl.u32 %v1510, 7
    %v1512 = vsub.s32 0, %v1511
    %v1513 = vrot.slane %v1508, %v1512
    %v1547 = vunpack.c.l.b16 %v1476
    %v1548 = vunpack.c.l.b16 %v1477
    %v1549 = vunpack.c.l.b16 %v1478
    %v1550 = vunpack.c.l.b16 %v1479
    %v1551 = vunpack.c.l.b16 %v1480
    %v1552 = vunpack.c.l.b16 %v1481
    %v1553 = vunpack.c.l.b16 %v1482
    %v1554 = vunpack.c.l.b16 %v1483
    %v1555 = vunpack.c.l.b16 %v1484
    %v1556 = vunpack.c.l.b16 %v1485
    %v1557 = vunpack.c.l.b16 %v1486
    %v1558 = vunpack.c.l.b16 %v1487
    %v1559 = vunpack.c.l.b16 %v1488
    %v1560 = vunpack.c.l.b16 %v1489
    %v1561 = vunpack.c.l.b16 %v1490
    %v1562 = vunpack.c.l.b16 %v1491
    %v1563 = vunpack.c.l.b16 %v1492
    %v1564 = vunpack.c.l.b16 %v1493
    %v1565 = vunpack.c.l.b16 %v1494
    %v1566 = vunpack.c.l.b16 %v1495
    %v1567 = vunpack.c.l.b16 %v1496
    %v1568 = vunpack.c.l.b16 %v1497
    %v1569 = vunpack.c.l.b16 %v1498
    %v1570 = vunpack.c.l.b16 %v1499
    %v1571 = vunpack.c.l.b16 %v1500
    %v1572 = vunpack.c.l.b16 %v1501
    %v1573 = vunpack.c.l.b16 %v1502
    %v1574 = vunpack.c.l.b16 %v1503
    %v1575 = vunpack.c.l.b16 %v1504
    %v1576 = vunpack.c.l.b16 %v1505
    %v1577 = vunpack.c.l.b16 %v1506
    %v1578 = vunpack.c.l.b16 %v1507
    %v1579 = vpack.c.b16 %v1548, %v1547
    %v1580 = vpack.c.b16 %v1550, %v1549
    %v1581 = vpack.c.b16 %v1552, %v1551
    %v1582 = vpack.c.b16 %v1554, %v1553
    %v1583 = vpack.c.b16 %v1556, %v1555
    %v1584 = vpack.c.b16 %v1558, %v1557
    %v1585 = vpack.c.b16 %v1560, %v1559
    %v1586 = vpack.c.b16 %v1562, %v1561
    %v1587 = vpack.c.b16 %v1564, %v1563
    %v1588 = vpack.c.b16 %v1566, %v1565
    %v1589 = vpack.c.b16 %v1568, %v1567
    %v1590 = vpack.c.b16 %v1570, %v1569
    %v1591 = vpack.c.b16 %v1572, %v1571
    %v1592 = vpack.c.b16 %v1574, %v1573
    %v1593 = vpack.c.b16 %v1576, %v1575
    %v1594 = vpack.c.b16 %v1578, %v1577
    %1611 = vmatprep.subr.bf16.mxu0 0
    %1612 = vmatpush1.bf16.msra.mxu0 %v1586
    %1613 = vmatprep.subr.bf16.mxu0 0
    %1614 = vmatpush1.bf16.msra.mxu0 %v1585
    %1615 = vmatprep.subr.bf16.mxu0 0
    %1616 = vmatpush1.bf16.msra.mxu0 %v1584
    %1617 = vmatprep.subr.bf16.mxu0 0
    %1618 = vmatpush1.bf16.msra.mxu0 %v1583
    %1619 = vmatprep.subr.bf16.mxu0 0
    %1620 = vmatpush1.bf16.msra.mxu0 %v1582
    %1621 = vmatprep.subr.bf16.mxu0 0
    %1622 = vmatpush1.bf16.msra.mxu0 %v1581
    %1623 = vmatprep.subr.bf16.mxu0 0
    %1624 = vmatpush1.bf16.msra.mxu0 %v1580
    %1625 = vmatprep.subr.bf16.mxu0 0
    %1626 = vmatpush1.bf16.msra.mxu0 %v1579
    %1627 = vmatprep.subr.bf16.mxu0 0
    %1628 = vmatpush2.bf16.msra.mxu0 %v1594
    %1629 = vmatprep.subr.bf16.mxu0 0
    %1630 = vmatpush2.bf16.msra.mxu0 %v1593
    %1631 = vmatprep.subr.bf16.mxu0 0
    %1632 = vmatpush2.bf16.msra.mxu0 %v1592
    %1633 = vmatprep.subr.bf16.mxu0 0
    %1634 = vmatpush2.bf16.msra.mxu0 %v1591
    %1635 = vmatprep.subr.bf16.mxu0 0
    %1636 = vmatpush2.bf16.msra.mxu0 %v1590
    %1637 = vmatprep.subr.bf16.mxu0 0
    %1638 = vmatpush2.bf16.msra.mxu0 %v1589
    %1639 = vmatprep.subr.bf16.mxu0 0
    %1640 = vmatpush2.bf16.msra.mxu0 %v1588
    %1641 = vmatprep.subr.bf16.mxu0 0
    %1642 = vmatpush2.bf16.msra.mxu0 %v1587
    %1643 = vmatprep.mubr.bf16.mxu0 %v1475
    %1644 = vmatmul.mubr.bf16.gmra.mxu0 %v1474
    %v1645 = vpop.f32.mrf.mxu0
    %v1646 = vadd.f32 %v1513, %v1645
    %v1647 = vpop.f32.mrf.mxu0
    %v1648 = vpop.f32.mrf.mxu0
    %v1649 = vpop.f32.mrf.mxu0
    %1650 = vdwg.mxu0
    %v1651 = vmax.f32 %v1646, 0.0
    %v1652 = vpack.c.bf16 %v1651, %v1651
    %v1653 = vld [vmem:[#allocation16] sm:$0xf]
    %v1654 = vld [vmem:[#allocation16 + $0x4] sm:$0xf]
    %v1655 = vld [vmem:[#allocation16 + $0x8] sm:$0xf]
    %v1656 = vld [vmem:[#allocation16 + $0xc] sm:$0xf]
    %v1657 = vld [vmem:[#allocation16 + $0x10] sm:$0xf]
    %v1658 = vld [vmem:[#allocation16 + $0x14] sm:$0xf]
    %v1659 = vld [vmem:[#allocation16 + $0x18] sm:$0xf]
    %v1660 = vld [vmem:[#allocation16 + $0x1c] sm:$0xf]
    %v1661 = vld [vmem:[#allocation16 + $0x20] sm:$0xf]
    %v1662 = vld [vmem:[#allocation16 + $0x24] sm:$0xf]
    %v1663 = vld [vmem:[#allocation16 + $0x28] sm:$0xf]
    %v1664 = vld [vmem:[#allocation16 + $0x2c] sm:$0xf]
    %v1665 = vld [vmem:[#allocation16 + $0x30] sm:$0xf]
    %v1666 = vld [vmem:[#allocation16 + $0x34] sm:$0xf]
    %v1667 = vld [vmem:[#allocation16 + $0x38] sm:$0xf]
    %v1668 = vld [vmem:[#allocation16 + $0x3c] sm:$0xf]
    %v1669 = vld [vmem:[%s14] sm:$0x1]
    %v1671 = vlaneseq
    %v1672 = vshrl.u32 %v1671, 7
    %v1673 = vsub.s32 0, %v1672
    %v1674 = vrot.slane %v1669, %v1673
    %v1692 = vunpack.c.l.b16 %v1653
    %v1693 = vunpack.c.l.b16 %v1654
    %v1694 = vunpack.c.l.b16 %v1655
    %v1695 = vunpack.c.l.b16 %v1656
    %v1696 = vunpack.c.l.b16 %v1657
    %v1697 = vunpack.c.l.b16 %v1658
    %v1698 = vunpack.c.l.b16 %v1659
    %v1699 = vunpack.c.l.b16 %v1660
    %v1700 = vunpack.c.l.b16 %v1661
    %v1701 = vunpack.c.l.b16 %v1662
    %v1702 = vunpack.c.l.b16 %v1663
    %v1703 = vunpack.c.l.b16 %v1664
    %v1704 = vunpack.c.l.b16 %v1665
    %v1705 = vunpack.c.l.b16 %v1666
    %v1706 = vunpack.c.l.b16 %v1667
    %v1707 = vunpack.c.l.b16 %v1668
    %v1708 = vpack.c.b16 %v1693, %v1692
    %v1709 = vpack.c.b16 %v1695, %v1694
    %v1710 = vpack.c.b16 %v1697, %v1696
    %v1711 = vpack.c.b16 %v1699, %v1698
    %v1712 = vpack.c.b16 %v1701, %v1700
    %v1713 = vpack.c.b16 %v1703, %v1702
    %v1714 = vpack.c.b16 %v1705, %v1704
    %v1715 = vpack.c.b16 %v1707, %v1706
    %1724 = vmatprep.subr.bf16.mxu0 0
    %1725 = vmatpush1.bf16.msra.mxu0 %v1715
    %1726 = vmatprep.subr.bf16.mxu0 0
    %1727 = vmatpush1.bf16.msra.mxu0 %v1714
    %1728 = vmatprep.subr.bf16.mxu0 0
    %1729 = vmatpush1.bf16.msra.mxu0 %v1713
    %1730 = vmatprep.subr.bf16.mxu0 0
    %1731 = vmatpush1.bf16.msra.mxu0 %v1712
    %1732 = vmatprep.subr.bf16.mxu0 0
    %1733 = vmatpush1.bf16.msra.mxu0 %v1711
    %1734 = vmatprep.subr.bf16.mxu0 0
    %1735 = vmatpush1.bf16.msra.mxu0 %v1710
    %1736 = vmatprep.subr.bf16.mxu0 0
    %1737 = vmatpush1.bf16.msra.mxu0 %v1709
    %1738 = vmatprep.subr.bf16.mxu0 0
    %1739 = vmatpush1.bf16.msra.mxu0 %v1708
    %1740 = vmatprep.subr.bf16.mxu0 0
    %1741 = vmatpush2.bf16.msra.mxu0 0
    %1742 = vmatprep.subr.bf16.mxu0 0
    %1743 = vmatpush2.bf16.msra.mxu0 0
    %1744 = vmatprep.subr.bf16.mxu0 0
    %1745 = vmatpush2.bf16.msra.mxu0 0
    %1746 = vmatprep.subr.bf16.mxu0 0
    %1747 = vmatpush2.bf16.msra.mxu0 0
    %1748 = vmatprep.subr.bf16.mxu0 0
    %1749 = vmatpush2.bf16.msra.mxu0 0
    %1750 = vmatprep.subr.bf16.mxu0 0
    %1751 = vmatpush2.bf16.msra.mxu0 0
    %1752 = vmatprep.subr.bf16.mxu0 0
    %1753 = vmatpush2.bf16.msra.mxu0 0
    %1754 = vmatprep.subr.bf16.mxu0 0
    %1755 = vmatpush2.bf16.msra.mxu0 0
    %1756 = vmatprep.mubr.bf16.mxu0 0
    %1757 = vmatmul.mubr.bf16.gmra.mxu0 %v1652
    %v1758 = vpop.f32.mrf.mxu0
    %v1759 = vadd.f32 %v1674, %v1758
    %v1760 = vpop.f32.mrf.mxu0
    %v1761 = vpop.f32.mrf.mxu0
    %v1762 = vpop.f32.mrf.mxu0
    %1763 = vdwg.mxu0
    %v1764 = vlaneseq
    %v1765 = vand.u32 %v1764, 127
    %vm1766 = vcmp.lt.s32.totalorder %v1765, 8
    %v1767 = vsel %vm1766, %v1759, -1e+30
    %1768 = vmax.xlane.f32.xlu0 %v1767
    %v1769 = vpop.xlane.xlu0 %1768
    %v1770 = vsub.f32 %v1767, %v1769
    %v1771 = vmul.f32 %v1770, 1.442695
    %v1772 = vpow.pop %v1771
    %v1773 = vsel %vm1766, %v1772, 0.0
    %1774 = vadd.xlane.f32.xlu0 %v1773
    %v1775 = vpop.xlane.xlu0 %1774
    %v1776 = vrcp.pop %v1775
    %v1777 = vmul.f32 %v1773, %v1776
    %1778 = vst [vmem:[#allocation17] sm:$0xff] %v1777
    // Predicated region
    $region98: #{tpu_custom_call.1} parent=1 // pred_check
      _
    $region99: #{tpu_custom_call.1} parent=1 // pred_check_branch
      %1780 = sbr.rel (0) target = $region101
    $region100: #{tpu_custom_call.1} parent=1 // pred_region
      %s1782 = ssub.s32 128, 128
      %1783 = vsyncadd [#allocation4], %s1782
      %s1785 = sshll.u32 [#allocation17], 4
      %s1786 = int_to_ptr.vmem [resolvable:$true] %s1785
      %1788 = dma.vmem_to_hbm [thread:$0]  %s1786, 128, %s15, [#allocation4]
    $region101: #{tpu_custom_call.1} parent=1 // pred_fallthru
      _
    // Predicated region
    $region102: #{tpu_custom_call.1} parent=1 // pred_check
      _
    $region103: #{tpu_custom_call.1} parent=1 // pred_check_branch
      %1790 = sbr.rel (0) target = $region105
    $region104: #{tpu_custom_call.1} parent=1 // pred_region
      %1791 = dma.done [#allocation4], 128
    $region105: #{tpu_custom_call.1} parent=1 // pred_fallthru
      _
    %1792 = vsyncpa [#allocation3], 1
    %1793 = vsyncpa [#allocation6], 1
    %1794 = vsyncpa [#allocation9], 1
    %1795 = vsyncpa [#allocation12], 1
    %1796 = vsyncpa [#allocation15], 1
    %1797 = vsyncpa [#allocation4], 1

</llo_original>
